<compile_context>
chip_gen: v7x
topology: tpu7x:2x2x1
jax: 0.10.0
libtpu: 0.0.40
codegen_flags: <defaults>
</compile_context>

<pallas_src>
import functools

import jax
import jax.numpy as jnp
from jax.experimental import pallas as pl
from jax.experimental.pallas import tpu as pltpu

_BN_EPS = 1e-5
_VMEM_LIMIT = 64 * 1024 * 1024


# ----------------------------------------------------------------------------
# Tile selection helpers
# ----------------------------------------------------------------------------

def _round_up(x, m):
    return ((x + m - 1) // m) * m


def _choose_tm(M):
    for tm in (512, 256, 128):
        if M % tm == 0:
            return tm, M
    if M < 128:
        m8 = _round_up(M, 8)
        return m8, m8
    return 128, _round_up(M, 128)


def _choose_tn(N):
    if N % 256 == 0:
        return 256, N
    if N % 128 == 0:
        return 128, N
    if N < 128:
        n8 = _round_up(N, 8)
        return n8, n8
    return 128, _round_up(N, 128)


def _choose_tk(K):
    if K <= 1024:                       # full-K, single k-step, weight stays VMEM-resident
        return K, K
    Kp = _round_up(K, 128)
    for tk in (1024, 896, 768, 640, 512, 384, 256, 128):
        if Kp % tk == 0:
            return tk, Kp
    return 128, Kp


# ----------------------------------------------------------------------------
# Pallas kernels: tiled matmul with fused BN-bias / ReLU / residual epilogue
# ----------------------------------------------------------------------------

def _mm_single_kernel(relu, has_id, *refs):
    """Single k-step tile: out = [ReLU](A @ W + b [+ identity]). bf16 in, f32 math."""
    if has_id:
        a_ref, w_ref, b_ref, id_ref, o_ref = refs
    else:
        a_ref, w_ref, b_ref, o_ref = refs
        id_ref = None
    r = jnp.dot(a_ref[...], w_ref[...], preferred_element_type=jnp.float32)
    r = r + b_ref[...]
    if id_ref is not None:
        r = r + id_ref[...].astype(jnp.float32)
    if relu:
        r = jnp.maximum(r, 0.0)
    o_ref[...] = r.astype(o_ref.dtype)


def _mm_multik_kernel(relu, a_ref, w_ref, b_ref, o_ref, acc_ref):
    """K-tiled matmul with f32 VMEM accumulator; bias/ReLU epilogue on the last k step."""
    @pl.when(pl.program_id(2) == 0)
    def _():
        acc_ref[...] = jnp.zeros_like(acc_ref)

    acc_ref[...] += jnp.dot(a_ref[...], w_ref[...],
                            preferred_element_type=jnp.float32)

    @pl.when(pl.program_id(2) == pl.num_programs(2) - 1)
    def _():
        r = acc_ref[...] + b_ref[...]
        if relu:
            r = jnp.maximum(r, 0.0)
        o_ref[...] = r.astype(o_ref.dtype)


@functools.lru_cache(maxsize=None)
def _mm_single_callable(Mp, Kp, Np, tm, tn, relu, has_id):
    kernel = functools.partial(_mm_single_kernel, relu, has_id)
    in_specs = [
        pl.BlockSpec((tm, Kp), lambda j, i: (i, 0)),
        pl.BlockSpec((Kp, tn), lambda j, i: (0, j)),   # W resident across the i sweep
        pl.BlockSpec((1, tn), lambda j, i: (0, j)),
    ]
    if has_id:
        in_specs.append(pl.BlockSpec((tm, tn), lambda j, i: (i, j)))
    f = pl.pallas_call(
        kernel,
        out_shape=jax.ShapeDtypeStruct((Mp, Np), jnp.bfloat16),
        grid_spec=pltpu.PrefetchScalarGridSpec(
            num_scalar_prefetch=0,
            grid=(Np // tn, Mp // tm),                 # j outer, i inner
            in_specs=in_specs,
            out_specs=pl.BlockSpec((tm, tn), lambda j, i: (i, j)),
        ),
        compiler_params=pltpu.CompilerParams(
            dimension_semantics=("parallel", "parallel"),
            vmem_limit_bytes=_VMEM_LIMIT),
    )
    return jax.jit(f)


@functools.lru_cache(maxsize=None)
def _mm_multik_callable(Mp, Kp, Np, tm, tn, tk, relu):
    kernel = functools.partial(_mm_multik_kernel, relu)
    f = pl.pallas_call(
        kernel,
        out_shape=jax.ShapeDtypeStruct((Mp, Np), jnp.bfloat16),
        grid_spec=pltpu.PrefetchScalarGridSpec(
            num_scalar_prefetch=0,
            grid=(Np // tn, Mp // tm, Kp // tk),
            in_specs=[
                pl.BlockSpec((tm, tk), lambda j, i, k: (i, k)),
                pl.BlockSpec((tk, tn), lambda j, i, k: (k, j)),
                pl.BlockSpec((1, tn), lambda j, i, k: (0, j)),
            ],
            out_specs=pl.BlockSpec((tm, tn), lambda j, i, k: (i, j)),
            scratch_shapes=[pltpu.VMEM((tm, tn), jnp.float32)],
        ),
        compiler_params=pltpu.CompilerParams(
            dimension_semantics=("parallel", "parallel", "arbitrary"),
            vmem_limit_bytes=_VMEM_LIMIT),
    )
    return jax.jit(f)


def matmul_bias(a, w, b, relu, identity=None):
    """a:(M,K) @ w:(K,N) + b:(1,N) [+ identity:(M,N)] [-> ReLU], bf16 out."""
    M, K = a.shape
    N = w.shape[1]
    tm, Mp = _choose_tm(M)
    tn, Np = _choose_tn(N)
    tk, Kp = _choose_tk(K)

    a = a.astype(jnp.bfloat16)
    w = w.astype(jnp.bfloat16)
    if Kp != K:
        a = jnp.pad(a, ((0, 0), (0, Kp - K)))
        w = jnp.pad(w, ((0, Kp - K), (0, 0)))
    if Np != N:
        w = jnp.pad(w, ((0, 0), (0, Np - N)))
        b = jnp.pad(b, ((0, 0), (0, Np - N)))
        if identity is not None:
            identity = jnp.pad(identity, ((0, 0), (0, Np - N)))
    if Mp != M:
        a = jnp.pad(a, ((0, Mp - M), (0, 0)))
        if identity is not None:
            identity = jnp.pad(identity, ((0, Mp - M), (0, 0)))

    if tk == Kp:
        f = _mm_single_callable(Mp, Kp, Np, tm, tn, bool(relu), identity is not None)
        if identity is not None:
            out = f(a, w, b, identity.astype(jnp.bfloat16))
        else:
            out = f(a, w, b)
    else:
        if identity is not None:
            raise NotImplementedError("fused residual only used on the single-k-step path")
        f = _mm_multik_callable(Mp, Kp, Np, tm, tn, tk, bool(relu))
        out = f(a, w, b)

    if (Mp, Np) != (M, N):
        out = out[:M, :N]
    return out


# ----------------------------------------------------------------------------
# Fused stride-1 3x3 conv kernel: taps gathered in VMEM (no im2col in HBM)
# ----------------------------------------------------------------------------

def _conv3x3_kernel(relu, Ho, Wo, x_ref, w_ref, b_ref, o_ref):
    cin = x_ref.shape[3]
    tn = o_ref.shape[3]
    x = x_ref[0]                                       # (Ho+2, Wo+2, Cin) padded image
    acc = None
    for t in range(9):
        di, dj = t // 3, t % 3
        a = x[di:di + Ho, dj:dj + Wo, :].reshape(Ho * Wo, cin)
        d = jnp.dot(a, w_ref[t], preferred_element_type=jnp.float32)
        acc = d if acc is None else acc + d
    r = acc + b_ref[...]
    if relu:
        r = jnp.maximum(r, 0.0)
    o_ref[0] = r.reshape(Ho, Wo, tn).astype(o_ref.dtype)


@functools.lru_cache(maxsize=None)
def _conv3x3_callable(N, Ho, Wo, Cin, Cout, tn, relu):
    kernel = functools.partial(_conv3x3_kernel, relu, Ho, Wo)
    f = pl.pallas_call(
        kernel,
        out_shape=jax.ShapeDtypeStruct((N, Ho, Wo, Cout), jnp.bfloat16),
        grid_spec=pltpu.PrefetchScalarGridSpec(
            num_scalar_prefetch=0,
            grid=(Cout // tn, N),                      # j outer, n inner -> weight reuse
            in_specs=[
                pl.BlockSpec((1, Ho + 2, Wo + 2, Cin), lambda j, n: (n, 0, 0, 0)),
                pl.BlockSpec((9, Cin, tn), lambda j, n: (0, 0, j)),
                pl.BlockSpec((1, tn), lambda j, n: (0, j)),
            ],
            out_specs=pl.BlockSpec((1, Ho, Wo, tn), lambda j, n: (n, 0, 0, j)),
        ),
        compiler_params=pltpu.CompilerParams(
            dimension_semantics=("parallel", "parallel"),
            vmem_limit_bytes=_VMEM_LIMIT),
    )
    return jax.jit(f)


def conv3x3_s1(x, p, relu=True):
    """3x3 / stride 1 / pad 1 conv with folded BN (+ReLU), fused tap gathering in VMEM."""
    N, H, W, C = x.shape
    Cout = p['w'].shape[2]
    tn = 256 if Cout % 256 == 0 else Cout
    xp = jnp.pad(x, ((0, 0), (1, 1), (1, 1), (0, 0)))
    try:
        f = _conv3x3_callable(N, H, W, C, Cout, int(tn), bool(relu))
        return f(xp, p['w'], p['b'])
    except Exception:
        # TODO(synk): fallback to im2col + tiled matmul if the fused tap-gather kernel
        #             fails to lower on this TPU generation.
        patches = [xp[:, i:i + H, j:j + W, :] for i in range(3) for j in range(3)]
        cols = jnp.concatenate(patches, axis=-1).reshape(N * H * W, 9 * C)
        out = matmul_bias(cols, p['w'].reshape(9 * C, Cout), p['b'], relu)
        return out.reshape(N, H, W, Cout)


# ----------------------------------------------------------------------------
# MaxPool2d(3, stride=2, padding=1) and AvgPool2d((12, 4))
# ----------------------------------------------------------------------------

def _maxpool_rows_kernel(Ho, x_ref, o_ref):
    # x_ref: (1, 2*Ho+2, Wo, C), columns already 3-tap maxed; 3-row window, stride 2.
    x = x_ref[0]
    p2 = jnp.maximum(x[0:2 * Ho], x[1:2 * Ho + 1])       # pairwise row max
    pr = p2.reshape(Ho, 2, p2.shape[1], p2.shape[2])     # leading-dim split only
    o_ref[0] = jnp.maximum(pr[:, 0], pr[:, 1])


@functools.lru_cache(maxsize=None)
def _maxpool_rows_callable(N, Ho, Wo, C):
    kernel = functools.partial(_maxpool_rows_kernel, Ho)
    f = pl.pallas_call(
        kernel,
        out_shape=jax.ShapeDtypeStruct((N, Ho, Wo, C), jnp.bfloat16),
        grid_spec=pltpu.PrefetchScalarGridSpec(
            num_scalar_prefetch=0,
            grid=(N,),
            in_specs=[pl.BlockSpec((1, 2 * Ho + 2, Wo, C), lambda n: (n, 0, 0, 0))],
            out_specs=pl.BlockSpec((1, Ho, Wo, C), lambda n: (n, 0, 0, 0)),
        ),
        compiler_params=pltpu.CompilerParams(
            dimension_semantics=("parallel",),
            vmem_limit_bytes=_VMEM_LIMIT),
    )
    return jax.jit(f)


def maxpool_3x3_s2_p1(x):
    """nn.MaxPool2d(3, stride=2, padding=1) on NHWC input (even H, W)."""
    N, H, W, C = x.shape
    assert H % 2 == 0 and W % 2 == 0
    Ho, Wo = H // 2, W // 2
    neg = float(jnp.finfo(x.dtype).min)
    xp = jnp.pad(x, ((0, 0), (1, 1), (1, 1), (0, 0)), constant_values=neg)
    # 3-tap column max at output-column stride 2 (one fused elementwise XLA op, ~1 MB);
    # the Pallas kernel above does the 3-row / stride-2 part per image.
    cm = jnp.maximum(jnp.maximum(xp[:, :, 0:2 * Wo:2, :], xp[:, :, 1:2 * Wo:2, :]),
                     xp[:, :, 2:2 * Wo + 1:2, :])
    return _maxpool_rows_callable(N, Ho, Wo, C)(cm)


def _avgpool_kernel(x_ref, o_ref):
    o_ref[...] = jnp.mean(x_ref[...].astype(jnp.float32), axis=1)


@functools.lru_cache(maxsize=None)
def _avgpool_callable(N, HW, C):
    f = pl.pallas_call(
        _avgpool_kernel,
        out_shape=jax.ShapeDtypeStruct((N, C), jnp.float32),
    )
    return jax.jit(f)


def global_avgpool_12x4(x):
    """nn.AvgPool2d((12, 4)) on the (N, 12, 4, C) backbone output + squeeze."""
    N, H, W, C = x.shape
    assert (H, W) == (12, 4), (H, W)
    return _avgpool_callable(N, H * W, C)(x.reshape(N, H * W, C))


# ----------------------------------------------------------------------------
# Conv dispatch (1x1 / im2col path) and the bottleneck block
# ----------------------------------------------------------------------------

def conv_mm(x, p, stride, pad, relu, identity=None):
    """Conv(+folded BN)[+ReLU][+fused residual] via Pallas tiled matmul."""
    kh, kw = p['kh'], p['kw']
    N, H, W, C = x.shape
    if kh == 1 and kw == 1:
        xs = x if stride == 1 else x[:, ::stride, ::stride, :]
        _, Ho, Wo, _ = xs.shape
        cols = xs.reshape(N * Ho * Wo, C)
    else:
        # im2col glue (only the 7x7 stem and the three stride-2 3x3 convs hit this path).
        xp = jnp.pad(x, ((0, 0), (pad, pad), (pad, pad), (0, 0)))
        Hp, Wp = xp.shape[1], xp.shape[2]
        Ho = (Hp - kh) // stride + 1
        Wo = (Wp - kw) // stride + 1
        patches = [xp[:, i:i + stride * Ho:stride, j:j + stride * Wo:stride, :]
                   for i in range(kh) for j in range(kw)]
        cols = jnp.concatenate(patches, axis=-1).reshape(N * Ho * Wo, kh * kw * C)
    id2 = None if identity is None else identity.reshape(N * Ho * Wo, -1)
    out = matmul_bias(cols, p['w'], p['b'], relu, id2)
    return out.reshape(N, Ho, Wo, -1)


def bottleneck(x, p):
    out = conv_mm(x, p['c1'], stride=1, pad=0, relu=True)
    if p['stride'] == 1:
        out = conv3x3_s1(out, p['c2'], relu=True)
    else:
        out = conv_mm(out, p['c2'], stride=p['stride'], pad=1, relu=True)
    if p['has_ds']:
        identity = conv_mm(x, p['ds'], stride=p['stride'], pad=0, relu=False)
    else:
        identity = x
    # conv3 (1x1) with the residual add + ReLU fused into the matmul epilogue.
    return conv_mm(out, p['c3'], stride=1, pad=0, relu=True, identity=identity)


# ----------------------------------------------------------------------------
# Synthetic ResNet-50 parameters: BN folded / reshaped / bf16-cast once at init
# ----------------------------------------------------------------------------

def _bn_params(key, c):
    k1, k2, k3, k4 = jax.random.split(key, 4)
    gamma = 1.0 + 0.1 * jax.random.uniform(k1, (c,), jnp.float32, -1.0, 1.0)
    beta = 0.05 * jax.random.normal(k2, (c,), jnp.float32)
    mean = 0.05 * jax.random.normal(k3, (c,), jnp.float32)
    var = 1.0 + 0.1 * jax.random.uniform(k4, (c,), jnp.float32, 0.0, 1.0)
    return gamma, beta, mean, var


def _conv_w(key, kh, kw, cin, cout):
    fan_in = kh * kw * cin
    std = (2.0 / fan_in) ** 0.5
    return std * jax.random.normal(key, (kh, kw, cin, cout), jnp.float32)


def _fold_bn(w_hwio, bn):
    gamma, beta, mean, var = bn
    scale = gamma / jnp.sqrt(var + _BN_EPS)
    return w_hwio * scale, beta - mean * scale


def init_params(key):
    keys = iter(jax.random.split(key, 256))

    def mm_conv(kh, kw, cin, cout):
        w, b = _fold_bn(_conv_w(next(keys), kh, kw, cin, cout), _bn_params(next(keys), cout))
        return {'kh': kh, 'kw': kw,
                'w': w.reshape(kh * kw * cin, cout).astype(jnp.bfloat16),
                'b': b.reshape(1, cout).astype(jnp.float32)}

    def c3_conv(cin, cout):
        w, b = _fold_bn(_conv_w(next(keys), 3, 3, cin, cout), _bn_params(next(keys), cout))
        return {'w': w.reshape(9, cin, cout).astype(jnp.bfloat16),
                'b': b.reshape(1, cout).astype(jnp.float32)}

    params = {'stem': mm_conv(7, 7, 3, 64)}
    layer_cfg = [(64, 3, 1), (128, 4, 2), (256, 6, 2), (512, 3, 2)]
    inplanes = 64
    layers = []
    for planes, blocks, stride in layer_cfg:
        blks = []
        for b in range(blocks):
            s = stride if b == 0 else 1
            has_ds = (b == 0) and (s != 1 or inplanes != planes * 4)
            p = {
                'c1': mm_conv(1, 1, inplanes, planes),
                'c2': c3_conv(planes, planes) if s == 1 else mm_conv(3, 3, planes, planes),
                'c3': mm_conv(1, 1, planes, planes * 4),
                'stride': s,
                'has_ds': has_ds,
            }
            if has_ds:
                p['ds'] = mm_conv(1, 1, inplanes, planes * 4)
            blks.append(p)
            inplanes = planes * 4
        layers.append(blks)
    params['layers'] = layers
    return params


# ----------------------------------------------------------------------------
# Triplet.forward (eval mode): backbone -> AvgPool2d((12, 4)) -> squeeze
# ----------------------------------------------------------------------------

def triplet_forward(params, x_nchw):
    # TODO(synk): only the eval-mode branch is implemented; training mode would just
    #             return ([feature], []) with the same feature tensor.
    x = jnp.transpose(x_nchw, (0, 2, 3, 1)).astype(jnp.bfloat16)    # NCHW -> NHWC, bf16
    x = conv_mm(x, params['stem'], stride=2, pad=3, relu=True)
    x = maxpool_3x3_s2_p1(x)
    for blks in params['layers']:
        for p in blks:
            x = bottleneck(x, p)
    return global_avgpool_12x4(x)                                   # (N, 2048) f32


if __name__ == "__main__":
    key = jax.random.PRNGKey(0)
    pkey, xkey = jax.random.split(key)
    params = init_params(pkey)

    # Person-ReID style input (N, C, H, W) = (2, 3, 384, 128); after the /32 backbone the
    # feature map is (2, 2048, 12, 4), matching AvgPool2d((12, 4)).
    x = jax.random.normal(xkey, (2, 3, 384, 128), jnp.float32)

    feature = triplet_forward(params, x)
    feature = jax.block_until_ready(feature)

    assert feature.shape == (2, 2048), feature.shape
    assert bool(jnp.all(jnp.isfinite(feature)))
    print("KERNEL_OK")
</pallas_src>

<mosaic_0001>
module attributes {stable_mosaic.version = 11 : i64} {
  func.func @_mm_single_kernel(%arg0: i32, %arg1: i32, %arg2: memref<512x147xbf16, #tpu.memory_space<vmem>>, %arg3: memref<147x64xbf16, #tpu.memory_space<vmem>>, %arg4: memref<1x64xf32, #tpu.memory_space<vmem>>, %arg5: memref<512x64xbf16, #tpu.memory_space<vmem>>) attributes {dimension_semantics = [#tpu.dimension_semantics<parallel>, #tpu.dimension_semantics<parallel>], iteration_bounds = array<i64: 1, 48>, scalar_prefetch = 0 : i64, scratch_operands = 0 : i64, tpu.core_type = #tpu.core_type<tc>, window_params = [{transform_indices = @transform_0, window_bounds = array<i64: 512, 147>}, {transform_indices = @transform_1, window_bounds = array<i64: 147, 64>}, {transform_indices = @transform_2, window_bounds = array<i64: 1, 64>}, {transform_indices = @transform_3, window_bounds = array<i64: 512, 64>}]} {
    %c0 = arith.constant 0 : index
    %c0_0 = arith.constant 0 : index
    %0 = vector.load %arg2[%c0, %c0_0] : memref<512x147xbf16, #tpu.memory_space<vmem>>, vector<512x147xbf16>
    %c0_1 = arith.constant 0 : index
    %c0_2 = arith.constant 0 : index
    %1 = vector.load %arg3[%c0_1, %c0_2] : memref<147x64xbf16, #tpu.memory_space<vmem>>, vector<147x64xbf16>
    %cst = arith.constant dense<0.000000e+00> : vector<512x64xf32>
    %2 = tpu.matmul %0, %1, %cst {dimension_numbers = #tpu.dot_dimension_numbers<[1], [0], [0], [1], [0, 0, 1, 1], [], []>} : vector<512x147xbf16>, vector<147x64xbf16>, vector<512x64xf32> -> vector<512x64xf32>
    %c0_3 = arith.constant 0 : index
    %c0_4 = arith.constant 0 : index
    %3 = vector.load %arg4[%c0_3, %c0_4] : memref<1x64xf32, #tpu.memory_space<vmem>>, vector<1x64xf32>
    %4 = vector.broadcast %3 : vector<1x64xf32> to vector<512x64xf32>
    %5 = arith.addf %2, %4 : vector<512x64xf32>
    %cst_5 = arith.constant 0.000000e+00 : f32
    %6 = vector.broadcast %cst_5 : f32 to vector<512x64xf32>
    %7 = arith.maximumf %5, %6 : vector<512x64xf32>
    %8 = arith.truncf %7 : vector<512x64xf32> to vector<512x64xbf16>
    %c0_6 = arith.constant 0 : index
    %c0_7 = arith.constant 0 : index
    %9 = vector.load %arg5[%c0_6, %c0_7] : memref<512x64xbf16, #tpu.memory_space<vmem>>, vector<512x64xbf16>
    tpu.vector_store %arg5[%c0_6, %c0_7], %8 {strides = array<i32>} : memref<512x64xbf16, #tpu.memory_space<vmem>>, vector<512x64xbf16>,
    return
  }
  func.func @transform_0(%arg0: i32, %arg1: i32) -> (i32, i32) {
    %c0_i32 = arith.constant 0 : i32
    %c0_i32_0 = arith.constant 0 : i32
    return %arg1, %c0_i32 : i32, i32
  }
  func.func @transform_1(%arg0: i32, %arg1: i32) -> (i32, i32) {
    %c0_i32 = arith.constant 0 : i32
    %c0_i32_0 = arith.constant 0 : i32
    return %c0_i32, %arg0 : i32, i32
  }
  func.func @transform_2(%arg0: i32, %arg1: i32) -> (i32, i32) {
    %c0_i32 = arith.constant 0 : i32
    %c0_i32_0 = arith.constant 0 : i32
    return %c0_i32, %arg0 : i32, i32
  }
  func.func @transform_3(%arg0: i32, %arg1: i32) -> (i32, i32) {
    %c0_i32 = arith.constant 0 : i32
    return %arg1, %arg0 : i32, i32
  }
}

</mosaic_0001>

<llo_original>
// kernel: tpu_custom_call.1
$region0: #{tpu_custom_call.1}
  #allocation0 [shape = 'u32[]', space=smem, size = 0x4, offset = 0x4, fixed_abs, tag = 'smem constant byte address 0x4 - core index']
  #allocation1 [shape = 'u32[144,128]{1,0:T(1,128)}', space=vmem, size = 0x12000, scoped, tag = 'internal scratch']
  %s0 = inlined_call_operand.hbm [shape: bf16[24576,147], index: 0, kind: input, shape index: {}]
  %s1 = inlined_call_operand.hbm [shape: bf16[147,64], index: 1, kind: input, shape index: {}]
  %s2 = inlined_call_operand.hbm [shape: f32[1,64], index: 2, kind: input, shape index: {}]
  %s3 = inlined_call_operand.hbm [shape: bf16[24576,64], index: 3, kind: output, shape index: {}]
  %s4 = sld [smem:[#allocation0]]
  $region57: #{tpu_custom_call.1} parent=0
    _
  %s6 = ssub.s32 1, %s4
  %s7 = scalar_select 0, %s6, %s4
  $region1: #{tpu_custom_call.1} parent=0
    #allocation2 [shape = 'u8[524288]{0}', space=vmem, size = 0x80000, scoped, tag = 'input window, operand 0']
    #allocation3 [shape = 's32[2]{0}', space=sflag, size = 0x8, scoped, tag = 'scoped memory for tpu_custom_call.1']
    #allocation4 [shape = 's32[2]{0}', space=sflag, size = 0x8, scoped, tag = 'scoped memory for tpu_custom_call.1']
    #allocation5 [shape = 'u8[38912]{0}', space=vmem, size = 0x9800, scoped, tag = 'input window, operand 1, single buffered']
    #allocation6 [shape = 's32[1]{0}', space=sflag, size = 0x4, scoped, tag = 'scoped memory for tpu_custom_call.1']
    #allocation7 [shape = 'u8[512]{0}', space=vmem, size = 0x400, scoped, tag = 'input window, operand 2, single buffered']
    #allocation8 [shape = 'u8[262144]{0}', space=vmem, size = 0x40000, scoped, tag = 'output window, operand 0']
    %8 = vsyncpa [#allocation3], 0
    %s9 = scalar_lea.sflag [#allocation3], 1
    %10 = vsyncpa %s9, 0
    %11 = vsyncpa [#allocation6], 0
    %12 = vsyncpa [#allocation4], 0
    %s13 = scalar_lea.sflag [#allocation4], 1
    %14 = vsyncpa %s13, 0
    loop: start=0, step=1, limit=50
    $region2: #{tpu_custom_call.1} parent=1 // loop_pre_header
      _
    $region3: #{tpu_custom_call.1} parent=1 // loop_header
      %s16 = sphi 0, %s20
      %p17 = scmp.ge.s32.totalorder %s16, 50
      %s23 = sphi 0, %s35
      %s24 = sphi 0, %s31
      %s25 = sphi 0, %s23
      %s26 = sphi 0, %s24
      %s27 = sphi 0, %s25
      %s28 = sphi 0, %s26
      %s38 = sphi 0, %s40
      %s41 = sphi 0, %s38
      %s42 = sphi 0, %s41
      %s58 = sphi 0, %s42
      %s64 = sphi 0, %s66
      %s67 = sphi 0, %s64
      %s68 = sphi 0, %s67
      %s84 = sphi 0, %s68
      %s90 = sphi 0, %s92
      %s93 = sphi 0, %s90
      %s94 = sphi 0, %s93
      %s110 = sphi 0, %s94
      %s118 = sphi 0, %s120
      %s121 = sphi 0, %s118
      %s122 = sphi 0, %s121
      %s138 = sphi 0, %s122
    $region4: #{tpu_custom_call.1} parent=1 // loop_header_branch
      %19 = sbr.rel (%p17) target = $region8
    $region5: #{tpu_custom_call.1} parent=1 // loop_body
      %s21 = ssub.s32 %s16, 1
      %s22 = ssub.s32 %s16, 2
      %s29 = sadd.s32 1, %s24
      %p30 = scmp.ge.s32.totalorder %s29, 48
      %s31 = scalar_select %p30, 0, %s29
      %s32 = sadd.s32 1, %s23
      %s33 = scalar_select %p30, %s32, %s23
      %p34 = scmp.ge.s32.totalorder %s33, 1
      %s35 = scalar_select %p34, 0, %s33
      %s36 = ssub.s32 %s24, %s31
      %p37 = scmp.eq.s32.totalorder %s36, 0
      %s39 = sadd.s32 %s38, 1
      %s40 = scalar_select %p37, %s38, %s39
      %p43 = pneg %p37
      %p44 = scmp.eq.s32.totalorder %s16, 47
      %p45 = por %p43, %p44
      %p46 = scmp.ne.s32.totalorder %s38, %s41
      %p47 = scmp.eq.s32.totalorder %s16, 0
      %p48 = por %p46, %p47
      %p49 = scmp.ne.s32.totalorder %s38, %s41
      %p50 = scmp.eq.s32.totalorder %s21, 47
      %p51 = por %p49, %p50
      %p52 = scmp.ne.s32.totalorder %s41, %s42
      %p53 = scmp.eq.s32.totalorder %s21, 0
      %p54 = por %p52, %p53
      %p55 = scmp.ne.s32.totalorder %s41, %s42
      %p56 = scmp.eq.s32.totalorder %s22, 47
      %p57 = por %p55, %p56
      %p59 = scmp.ne.s32.totalorder %s42, %s58
      %p60 = scmp.eq.s32.totalorder %s22, 0
      %p61 = por %p59, %p60
      %s62 = ssub.s32 %s23, %s35
      %p63 = scmp.eq.s32.totalorder %s62, 0
      %s65 = sadd.s32 %s64, 1
      %s66 = scalar_select %p63, %s64, %s65
      %p69 = pneg %p63
      %p70 = scmp.eq.s32.totalorder %s16, 47
      %p71 = por %p69, %p70
      %p72 = scmp.ne.s32.totalorder %s64, %s67
      %p73 = scmp.eq.s32.totalorder %s16, 0
      %p74 = por %p72, %p73
      %p75 = scmp.ne.s32.totalorder %s64, %s67
      %p76 = scmp.eq.s32.totalorder %s21, 47
      %p77 = por %p75, %p76
      %p78 = scmp.ne.s32.totalorder %s67, %s68
      %p79 = scmp.eq.s32.totalorder %s21, 0
      %p80 = por %p78, %p79
      %p81 = scmp.ne.s32.totalorder %s67, %s68
      %p82 = scmp.eq.s32.totalorder %s22, 47
      %p83 = por %p81, %p82
      %p85 = scmp.ne.s32.totalorder %s68, %s84
      %p86 = scmp.eq.s32.totalorder %s22, 0
      %p87 = por %p85, %p86
      %s88 = ssub.s32 %s23, %s35
      %p89 = scmp.eq.s32.totalorder %s88, 0
      %s91 = sadd.s32 %s90, 1
      %s92 = scalar_select %p89, %s90, %s91
      %p95 = pneg %p89
      %p96 = scmp.eq.s32.totalorder %s16, 47
      %p97 = por %p95, %p96
      %p98 = scmp.ne.s32.totalorder %s90, %s93
      %p99 = scmp.eq.s32.totalorder %s16, 0
      %p100 = por %p98, %p99
      %p101 = scmp.ne.s32.totalorder %s90, %s93
      %p102 = scmp.eq.s32.totalorder %s21, 47
      %p103 = por %p101, %p102
      %p104 = scmp.ne.s32.totalorder %s93, %s94
      %p105 = scmp.eq.s32.totalorder %s21, 0
      %p106 = por %p104, %p105
      %p107 = scmp.ne.s32.totalorder %s93, %s94
      %p108 = scmp.eq.s32.totalorder %s22, 47
      %p109 = por %p107, %p108
      %p111 = scmp.ne.s32.totalorder %s94, %s110
      %p112 = scmp.eq.s32.totalorder %s22, 0
      %p113 = por %p111, %p112
      %s114 = ssub.s32 %s24, %s31
      %s115 = ssub.s32 %s23, %s35
      %s116 = sor.u32 %s114, %s115
      %p117 = scmp.eq.s32.totalorder %s116, 0
      %s119 = sadd.s32 %s118, 1
      %s120 = scalar_select %p117, %s118, %s119
      %p123 = pneg %p117
      %p124 = scmp.eq.s32.totalorder %s16, 47
      %p125 = por %p123, %p124
      %p126 = scmp.ne.s32.totalorder %s118, %s121
      %p127 = scmp.eq.s32.totalorder %s16, 0
      %p128 = por %p126, %p127
      %p129 = scmp.ne.s32.totalorder %s118, %s121
      %p130 = scmp.eq.s32.totalorder %s21, 47
      %p131 = por %p129, %p130
      %p132 = scmp.ne.s32.totalorder %s121, %s122
      %p133 = scmp.eq.s32.totalorder %s21, 0
      %p134 = por %p132, %p133
      %p135 = scmp.ne.s32.totalorder %s121, %s122
      %p136 = scmp.eq.s32.totalorder %s22, 47
      %p137 = por %p135, %p136
      %p139 = scmp.ne.s32.totalorder %s122, %s138
      %p140 = scmp.eq.s32.totalorder %s22, 0
      %p141 = por %p139, %p140
      %p142 = scmp.le.s32.totalorder 1, %s16
      %p143 = scmp.lt.s32.totalorder %s16, 49
      %p144 = pnand %p142, %p143
      %p145 = pneg %p144
      // Predicated region
      $region9: #{tpu_custom_call.1} parent=5 // pred_check
        _
      $region10: #{tpu_custom_call.1} parent=5 // pred_check_branch
        %147 = sbr.rel (%p144) target = $region12
      $region11: #{tpu_custom_call.1} parent=5 // pred_region
        %s148 = ssub.s32 %s16, 1
        // Predicated region
        $region13: #{tpu_custom_call.1} parent=11 // pred_check
          %p149 = pneg %p80
        $region14: #{tpu_custom_call.1} parent=11 // pred_check_branch
          %151 = sbr.rel (%p149) target = $region16
        $region15: #{tpu_custom_call.1} parent=11 // pred_region
          %s153 = ssub.s32 1216, 1216
          %154 = vsyncadd [#allocation6], %s153
          %s155 = smul.addr %s25, 64
          %s156 = scalar_lea.hbm %s1, %s155
          %s157 = sshll.u32 [#allocation5], 4
          %s158 = int_to_ptr.vmem [resolvable:$true] %s157
          %163 = dma.hbm_to_vmem [thread:$0]  %s156, 1216, %s158, [#allocation6], 64, 64, 4
        $region16: #{tpu_custom_call.1} parent=11 // pred_fallthru
          _
        // Predicated region
        $region17: #{tpu_custom_call.1} parent=11 // pred_check
          %p164 = pneg %p106
        $region18: #{tpu_custom_call.1} parent=11 // pred_check_branch
          %166 = sbr.rel (%p164) target = $region20
        $region19: #{tpu_custom_call.1} parent=11 // pred_region
          %s168 = ssub.s32 16, 16
          %169 = vsyncadd [#allocation6], %s168
          %s170 = smul.addr %s25, 16
          %s171 = scalar_lea.hbm %s2, %s170
          %s173 = sshll.u32 [#allocation7], 4
          %s174 = int_to_ptr.vmem [resolvable:$true] %s173
          %176 = dma.hbm_to_vmem [thread:$0]  %s171, 16, %s174, [#allocation6]
        $region20: #{tpu_custom_call.1} parent=11 // pred_fallthru
          _
      $region12: #{tpu_custom_call.1} parent=5 // pred_fallthru
        _
      %p177 = scmp.lt.s32.totalorder %s16, 48
      // Predicated region
      $region21: #{tpu_custom_call.1} parent=5 // pred_check
        %p178 = pneg %p177
      $region22: #{tpu_custom_call.1} parent=5 // pred_check_branch
        %180 = sbr.rel (%p178) target = $region24
      $region23: #{tpu_custom_call.1} parent=5 // pred_region
        // Predicated region
        $region25: #{tpu_custom_call.1} parent=23 // pred_check
          %p181 = pneg %p48
        $region26: #{tpu_custom_call.1} parent=23 // pred_check_branch
          %183 = sbr.rel (%p181) target = $region28
        $region27: #{tpu_custom_call.1} parent=23 // pred_region
          %s184 = sand.u32 %s38, 1
          %s185 = scalar_lea.sflag [#allocation3], %s184
          %s186 = sand.u32 %s38, 1
          %s187 = smul.addr %s186, 512
          %s188 = scalar_lea.vmem [#allocation2], %s187
          %s189 = smul.u32 64, %s24
          %s191 = ssub.s32 8192, 8192
          %192 = vsyncadd %s185, %s191
          %s193 = smul.addr %s189, 2
          %s194 = smul.addr %s193, 64
          %s195 = scalar_lea.hbm %s0, %s194
          %s196 = sshll.u32 %s188, 4
          %s197 = int_to_ptr.vmem [resolvable:$true] %s196
          %202 = dma.hbm_to_vmem [thread:$0]  %s195, 8192, %s197, %s185, 128, 128, 8
        $region28: #{tpu_custom_call.1} parent=23 // pred_fallthru
          _
      $region24: #{tpu_custom_call.1} parent=5 // pred_fallthru
        _
      %p203 = scmp.le.s32.totalorder 1, %s16
      %p204 = scmp.lt.s32.totalorder %s16, 49
      %p205 = pnand %p203, %p204
      %p206 = pneg %p205
      // Predicated region
      $region29: #{tpu_custom_call.1} parent=5 // pred_check
        _
      $region30: #{tpu_custom_call.1} parent=5 // pred_check_branch
        %208 = sbr.rel (%p205) target = $region32
      $region31: #{tpu_custom_call.1} parent=5 // pred_region
        %s209 = ssub.s32 %s16, 1
        %s210 = sand.u32 %s41, 1
        %s211 = scalar_lea.sflag [#allocation3], %s210
        %s212 = sand.u32 %s41, 1
        %s213 = smul.addr %s212, 512
        %s214 = scalar_lea.vmem [#allocation2], %s213
        // Predicated region
        $region33: #{tpu_custom_call.1} parent=31 // pred_check
          %p215 = pneg %p54
        $region34: #{tpu_custom_call.1} parent=31 // pred_check_branch
          %217 = sbr.rel (%p215) target = $region36
        $region35: #{tpu_custom_call.1} parent=31 // pred_region
          %218 = dma.done %s211, 8192
        $region36: #{tpu_custom_call.1} parent=31 // pred_fallthru
          _
        // Predicated region
        $region37: #{tpu_custom_call.1} parent=31 // pred_check
          %p219 = pneg %p80
        $region38: #{tpu_custom_call.1} parent=31 // pred_check_branch
          %221 = sbr.rel (%p219) target = $region40
        $region39: #{tpu_custom_call.1} parent=31 // pred_region
          %222 = dma.done [#allocation6], 1216
        $region40: #{tpu_custom_call.1} parent=31 // pred_fallthru
          _
        // Predicated region
        $region41: #{tpu_custom_call.1} parent=31 // pred_check
          %p223 = pneg %p106
        $region42: #{tpu_custom_call.1} parent=31 // pred_check_branch
          %225 = sbr.rel (%p223) target = $region44
        $region43: #{tpu_custom_call.1} parent=31 // pred_region
          %226 = dma.done [#allocation6], 16
        $region44: #{tpu_custom_call.1} parent=31 // pred_fallthru
          _
        %s227 = sand.u32 %s41, 1
        %s228 = scalar_lea.sflag [#allocation3], %s227
        %s229 = sand.u32 %s41, 1
        %s230 = smul.addr %s229, 512
        %s231 = scalar_lea.vmem [#allocation2], %s230
        %p232 = pneg %p54
        %p233 = pneg %p51
        %p234 = pneg %p80
        %p235 = pneg %p77
        %p236 = pneg %p106
        %p237 = pneg %p103
        %p238 = pneg %p134
        %p239 = pneg %p131
        %s240 = sand.u32 %s121, 1
        %s241 = scalar_lea.sflag [#allocation4], %s240
        %s242 = sand.u32 %s121, 1
        %s243 = smul.addr %s242, 256
        %s244 = scalar_lea.vmem [#allocation8], %s243
        %s245 = smul.u32 64, %s26
        %s246 = smul.u32 64, %s26
        %v248 = vld [vmem:[%s214] sm:$0xff]
        %v249 = vld [vmem:[%s214 + $0x8] sm:$0xff]
        %v250 = vld [vmem:[%s214 + $0x10] sm:$0xff]
        %v251 = vld [vmem:[%s214 + $0x18] sm:$0xff]
        %v252 = vld [vmem:[%s214 + $0x20] sm:$0xff]
        %v253 = vld [vmem:[%s214 + $0x28] sm:$0xff]
        %v254 = vld [vmem:[%s214 + $0x30] sm:$0xff]
        %v255 = vld [vmem:[%s214 + $0x38] sm:$0xff]
        %v256 = vld [vmem:[%s214 + $0x40] sm:$0xff]
        %v257 = vld [vmem:[%s214 + $0x48] sm:$0xff]
        %v258 = vld [vmem:[%s214 + $0x50] sm:$0xff]
        %v259 = vld [vmem:[%s214 + $0x58] sm:$0xff]
        %v260 = vld [vmem:[%s214 + $0x60] sm:$0xff]
        %v261 = vld [vmem:[%s214 + $0x68] sm:$0xff]
        %v262 = vld [vmem:[%s214 + $0x70] sm:$0xff]
        %v263 = vld [vmem:[%s214 + $0x78] sm:$0xff]
        %v264 = vld [vmem:[%s214 + $0x80] sm:$0xff]
        %v265 = vld [vmem:[%s214 + $0x88] sm:$0xff]
        %v266 = vld [vmem:[%s214 + $0x90] sm:$0xff]
        %v267 = vld [vmem:[%s214 + $0x98] sm:$0xff]
        %v268 = vld [vmem:[%s214 + $0xa0] sm:$0xff]
        %v269 = vld [vmem:[%s214 + $0xa8] sm:$0xff]
        %v270 = vld [vmem:[%s214 + $0xb0] sm:$0xff]
        %v271 = vld [vmem:[%s214 + $0xb8] sm:$0xff]
        %v272 = vld [vmem:[%s214 + $0xc0] sm:$0xff]
        %v273 = vld [vmem:[%s214 + $0xc8] sm:$0xff]
        %v274 = vld [vmem:[%s214 + $0xd0] sm:$0xff]
        %v275 = vld [vmem:[%s214 + $0xd8] sm:$0xff]
        %v276 = vld [vmem:[%s214 + $0xe0] sm:$0xff]
        %v277 = vld [vmem:[%s214 + $0xe8] sm:$0xff]
        %v278 = vld [vmem:[%s214 + $0xf0] sm:$0xff]
        %v279 = vld [vmem:[%s214 + $0xf8] sm:$0xff]
        %v280 = vld [vmem:[%s214 + $0x100] sm:$0xff]
        %v281 = vld [vmem:[%s214 + $0x108] sm:$0xff]
        %v282 = vld [vmem:[%s214 + $0x110] sm:$0xff]
        %v283 = vld [vmem:[%s214 + $0x118] sm:$0xff]
        %v284 = vld [vmem:[%s214 + $0x120] sm:$0xff]
        %v285 = vld [vmem:[%s214 + $0x128] sm:$0xff]
        %v286 = vld [vmem:[%s214 + $0x130] sm:$0xff]
        %v287 = vld [vmem:[%s214 + $0x138] sm:$0xff]
        %v288 = vld [vmem:[%s214 + $0x140] sm:$0xff]
        %v289 = vld [vmem:[%s214 + $0x148] sm:$0xff]
        %v290 = vld [vmem:[%s214 + $0x150] sm:$0xff]
        %v291 = vld [vmem:[%s214 + $0x158] sm:$0xff]
        %v292 = vld [vmem:[%s214 + $0x160] sm:$0xff]
        %v293 = vld [vmem:[%s214 + $0x168] sm:$0xff]
        %v294 = vld [vmem:[%s214 + $0x170] sm:$0xff]
        %v295 = vld [vmem:[%s214 + $0x178] sm:$0xff]
        %v296 = vld [vmem:[%s214 + $0x180] sm:$0xff]
        %v297 = vld [vmem:[%s214 + $0x188] sm:$0xff]
        %v298 = vld [vmem:[%s214 + $0x190] sm:$0xff]
        %v299 = vld [vmem:[%s214 + $0x198] sm:$0xff]
        %v300 = vld [vmem:[%s214 + $0x1a0] sm:$0xff]
        %v301 = vld [vmem:[%s214 + $0x1a8] sm:$0xff]
        %v302 = vld [vmem:[%s214 + $0x1b0] sm:$0xff]
        %v303 = vld [vmem:[%s214 + $0x1b8] sm:$0xff]
        %v304 = vld [vmem:[%s214 + $0x1c0] sm:$0xff]
        %v305 = vld [vmem:[%s214 + $0x1c8] sm:$0xff]
        %v306 = vld [vmem:[%s214 + $0x1d0] sm:$0xff]
        %v307 = vld [vmem:[%s214 + $0x1d8] sm:$0xff]
        %v308 = vld [vmem:[%s214 + $0x1e0] sm:$0xff]
        %v309 = vld [vmem:[%s214 + $0x1e8] sm:$0xff]
        %v310 = vld [vmem:[%s214 + $0x1f0] sm:$0xff]
        %v311 = vld [vmem:[%s214 + $0x1f8] sm:$0xff]
        %v312 = vld [vmem:[#allocation5] sm:$0xf]
        %v313 = vld [vmem:[#allocation5 + $0x4] sm:$0xf]
        %v314 = vld [vmem:[#allocation5 + $0x8] sm:$0xf]
        %v315 = vld [vmem:[#allocation5 + $0xc] sm:$0xf]
        %v316 = vld [vmem:[#allocation5 + $0x10] sm:$0xf]
        %v317 = vld [vmem:[#allocation5 + $0x14] sm:$0xf]
        %v318 = vld [vmem:[#allocation5 + $0x18] sm:$0xf]
        %v319 = vld [vmem:[#allocation5 + $0x1c] sm:$0xf]
        %v320 = vld [vmem:[#allocation5 + $0x20] sm:$0xf]
        %v321 = vld [vmem:[#allocation5 + $0x24] sm:$0xf]
        %v322 = vld [vmem:[#allocation5 + $0x28] sm:$0xf]
        %v323 = vld [vmem:[#allocation5 + $0x2c] sm:$0xf]
        %v324 = vld [vmem:[#allocation5 + $0x30] sm:$0xf]
        %v325 = vld [vmem:[#allocation5 + $0x34] sm:$0xf]
        %v326 = vld [vmem:[#allocation5 + $0x38] sm:$0xf]
        %v327 = vld [vmem:[#allocation5 + $0x3c] sm:$0xf]
        %v328 = vld [vmem:[#allocation5 + $0x40] sm:$0xf]
        %v329 = vld [vmem:[#allocation5 + $0x44] sm:$0xf]
        %v330 = vld [vmem:[#allocation5 + $0x48] sm:$0x3]
        %v331 = vld [vmem:[#allocation7] sm:$0x1]
        %v333 = vlaneseq
        %v334 = vshrl.u32 %v333, 7
        %v335 = vsub.s32 0, %v334
        %v336 = vrot.slane %v331, %v335
        %v402 = vunpack.c.l.b16 %v248
        %v403 = vunpack.c.h.b16 %v248
        %v404 = vunpack.c.l.b16 %v249
        %v405 = vunpack.c.h.b16 %v249
        %v406 = vunpack.c.l.b16 %v250
        %v407 = vunpack.c.h.b16 %v250
        %v408 = vunpack.c.l.b16 %v251
        %v409 = vunpack.c.h.b16 %v251
        %v410 = vunpack.c.l.b16 %v252
        %v411 = vunpack.c.h.b16 %v252
        %v412 = vunpack.c.l.b16 %v253
        %v413 = vunpack.c.h.b16 %v253
        %v414 = vunpack.c.l.b16 %v254
        %v415 = vunpack.c.h.b16 %v254
        %v416 = vunpack.c.l.b16 %v255
        %v417 = vunpack.c.h.b16 %v255
        %v418 = vunpack.c.l.b16 %v256
        %v419 = vunpack.c.h.b16 %v256
        %v420 = vunpack.c.l.b16 %v257
        %v421 = vunpack.c.h.b16 %v257
        %v422 = vunpack.c.l.b16 %v258
        %v423 = vunpack.c.h.b16 %v258
        %v424 = vunpack.c.l.b16 %v259
        %v425 = vunpack.c.h.b16 %v259
        %v426 = vunpack.c.l.b16 %v260
        %v427 = vunpack.c.h.b16 %v260
        %v428 = vunpack.c.l.b16 %v261
        %v429 = vunpack.c.h.b16 %v261
        %v430 = vunpack.c.l.b16 %v262
        %v431 = vunpack.c.h.b16 %v262
        %v432 = vunpack.c.l.b16 %v263
        %v433 = vunpack.c.h.b16 %v263
        %v434 = vunpack.c.l.b16 %v264
        %v435 = vunpack.c.h.b16 %v264
        %v436 = vunpack.c.l.b16 %v265
        %v437 = vunpack.c.h.b16 %v265
        %v438 = vunpack.c.l.b16 %v266
        %v439 = vunpack.c.h.b16 %v266
        %v440 = vunpack.c.l.b16 %v267
        %v441 = vunpack.c.h.b16 %v267
        %v442 = vunpack.c.l.b16 %v268
        %v443 = vunpack.c.h.b16 %v268
        %v444 = vunpack.c.l.b16 %v269
        %v445 = vunpack.c.h.b16 %v269
        %v446 = vunpack.c.l.b16 %v270
        %v447 = vunpack.c.h.b16 %v270
        %v448 = vunpack.c.l.b16 %v271
        %v449 = vunpack.c.h.b16 %v271
        %v450 = vunpack.c.l.b16 %v272
        %v451 = vunpack.c.h.b16 %v272
        %v452 = vunpack.c.l.b16 %v273
        %v453 = vunpack.c.h.b16 %v273
        %v454 = vunpack.c.l.b16 %v274
        %v455 = vunpack.c.h.b16 %v274
        %v456 = vunpack.c.l.b16 %v275
        %v457 = vunpack.c.h.b16 %v275
        %v458 = vunpack.c.l.b16 %v276
        %v459 = vunpack.c.h.b16 %v276
        %v460 = vunpack.c.l.b16 %v277
        %v461 = vunpack.c.h.b16 %v277
        %v462 = vunpack.c.l.b16 %v278
        %v463 = vunpack.c.h.b16 %v278
        %v464 = vunpack.c.l.b16 %v279
        %v465 = vunpack.c.h.b16 %v279
        %v466 = vunpack.c.l.b16 %v280
        %v467 = vunpack.c.h.b16 %v280
        %v468 = vunpack.c.l.b16 %v281
        %v469 = vunpack.c.h.b16 %v281
        %v470 = vunpack.c.l.b16 %v282
        %v471 = vunpack.c.h.b16 %v282
        %v472 = vunpack.c.l.b16 %v283
        %v473 = vunpack.c.h.b16 %v283
        %v474 = vunpack.c.l.b16 %v284
        %v475 = vunpack.c.h.b16 %v284
        %v476 = vunpack.c.l.b16 %v285
        %v477 = vunpack.c.h.b16 %v285
        %v478 = vunpack.c.l.b16 %v286
        %v479 = vunpack.c.h.b16 %v286
        %v480 = vunpack.c.l.b16 %v287
        %v481 = vunpack.c.h.b16 %v287
        %v482 = vunpack.c.l.b16 %v288
        %v483 = vunpack.c.h.b16 %v288
        %v484 = vunpack.c.l.b16 %v289
        %v485 = vunpack.c.h.b16 %v289
        %v486 = vunpack.c.l.b16 %v290
        %v487 = vunpack.c.h.b16 %v290
        %v488 = vunpack.c.l.b16 %v291
        %v489 = vunpack.c.h.b16 %v291
        %v490 = vunpack.c.l.b16 %v292
        %v491 = vunpack.c.h.b16 %v292
        %v492 = vunpack.c.l.b16 %v293
        %v493 = vunpack.c.h.b16 %v293
        %v494 = vunpack.c.l.b16 %v294
        %v495 = vunpack.c.h.b16 %v294
        %v496 = vunpack.c.l.b16 %v295
        %v497 = vunpack.c.h.b16 %v295
        %v498 = vunpack.c.l.b16 %v296
        %v499 = vunpack.c.h.b16 %v296
        %v500 = vunpack.c.l.b16 %v297
        %v501 = vunpack.c.h.b16 %v297
        %v502 = vunpack.c.l.b16 %v298
        %v503 = vunpack.c.h.b16 %v298
        %v504 = vunpack.c.l.b16 %v299
        %v505 = vunpack.c.h.b16 %v299
        %v506 = vunpack.c.l.b16 %v300
        %v507 = vunpack.c.h.b16 %v300
        %v508 = vunpack.c.l.b16 %v301
        %v509 = vunpack.c.h.b16 %v301
        %v510 = vunpack.c.l.b16 %v302
        %v511 = vunpack.c.h.b16 %v302
        %v512 = vunpack.c.l.b16 %v303
        %v513 = vunpack.c.h.b16 %v303
        %v514 = vunpack.c.l.b16 %v304
        %v515 = vunpack.c.h.b16 %v304
        %v516 = vunpack.c.l.b16 %v305
        %v517 = vunpack.c.h.b16 %v305
        %v518 = vunpack.c.l.b16 %v306
        %v519 = vunpack.c.h.b16 %v306
        %v520 = vunpack.c.l.b16 %v307
        %v521 = vunpack.c.h.b16 %v307
        %v522 = vunpack.c.l.b16 %v308
        %v523 = vunpack.c.h.b16 %v308
        %v524 = vunpack.c.l.b16 %v309
        %v525 = vunpack.c.h.b16 %v309
        %v526 = vunpack.c.l.b16 %v310
        %v527 = vunpack.c.h.b16 %v310
        %v528 = vunpack.c.l.b16 %v311
        %v529 = vunpack.c.h.b16 %v311
        %v530 = vpack.c.b16 %v404, %v402
        %v531 = vpack.c.b16 %v405, %v403
        %v532 = vpack.c.b16 %v408, %v406
        %v533 = vpack.c.b16 %v409, %v407
        %v534 = vpack.c.b16 %v412, %v410
        %v535 = vpack.c.b16 %v413, %v411
        %v536 = vpack.c.b16 %v416, %v414
        %v537 = vpack.c.b16 %v417, %v415
        %v538 = vpack.c.b16 %v420, %v418
        %v539 = vpack.c.b16 %v421, %v419
        %v540 = vpack.c.b16 %v424, %v422
        %v541 = vpack.c.b16 %v425, %v423
        %v542 = vpack.c.b16 %v428, %v426
        %v543 = vpack.c.b16 %v429, %v427
        %v544 = vpack.c.b16 %v432, %v430
        %v545 = vpack.c.b16 %v433, %v431
        %v546 = vpack.c.b16 %v436, %v434
        %v547 = vpack.c.b16 %v437, %v435
        %v548 = vpack.c.b16 %v440, %v438
        %v549 = vpack.c.b16 %v441, %v439
        %v550 = vpack.c.b16 %v444, %v442
        %v551 = vpack.c.b16 %v445, %v443
        %v552 = vpack.c.b16 %v448, %v446
        %v553 = vpack.c.b16 %v449, %v447
        %v554 = vpack.c.b16 %v452, %v450
        %v555 = vpack.c.b16 %v453, %v451
        %v556 = vpack.c.b16 %v456, %v454
        %v557 = vpack.c.b16 %v457, %v455
        %v558 = vpack.c.b16 %v460, %v458
        %v559 = vpack.c.b16 %v461, %v459
        %v560 = vpack.c.b16 %v464, %v462
        %v561 = vpack.c.b16 %v465, %v463
        %v562 = vpack.c.b16 %v468, %v466
        %v563 = vpack.c.b16 %v469, %v467
        %v564 = vpack.c.b16 %v472, %v470
        %v565 = vpack.c.b16 %v473, %v471
        %v566 = vpack.c.b16 %v476, %v474
        %v567 = vpack.c.b16 %v477, %v475
        %v568 = vpack.c.b16 %v480, %v478
        %v569 = vpack.c.b16 %v481, %v479
        %v570 = vpack.c.b16 %v484, %v482
        %v571 = vpack.c.b16 %v485, %v483
        %v572 = vpack.c.b16 %v488, %v486
        %v573 = vpack.c.b16 %v489, %v487
        %v574 = vpack.c.b16 %v492, %v490
        %v575 = vpack.c.b16 %v493, %v491
        %v576 = vpack.c.b16 %v496, %v494
        %v577 = vpack.c.b16 %v497, %v495
        %v578 = vpack.c.b16 %v500, %v498
        %v579 = vpack.c.b16 %v501, %v499
        %v580 = vpack.c.b16 %v504, %v502
        %v581 = vpack.c.b16 %v505, %v503
        %v582 = vpack.c.b16 %v508, %v506
        %v583 = vpack.c.b16 %v509, %v507
        %v584 = vpack.c.b16 %v512, %v510
        %v585 = vpack.c.b16 %v513, %v511
        %v586 = vpack.c.b16 %v516, %v514
        %v587 = vpack.c.b16 %v517, %v515
        %v588 = vpack.c.b16 %v520, %v518
        %v589 = vpack.c.b16 %v521, %v519
        %v590 = vpack.c.b16 %v524, %v522
        %v591 = vpack.c.b16 %v525, %v523
        %v592 = vpack.c.b16 %v528, %v526
        %v593 = vpack.c.b16 %v529, %v527
        %v645 = vunpack.c.l.b16 %v312
        %v646 = vunpack.c.l.b16 %v313
        %v647 = vunpack.c.l.b16 %v314
        %v648 = vunpack.c.l.b16 %v315
        %v649 = vunpack.c.l.b16 %v316
        %v650 = vunpack.c.l.b16 %v317
        %v651 = vunpack.c.l.b16 %v318
        %v652 = vunpack.c.l.b16 %v319
        %v653 = vunpack.c.l.b16 %v320
        %v654 = vunpack.c.l.b16 %v321
        %v655 = vunpack.c.l.b16 %v322
        %v656 = vunpack.c.l.b16 %v323
        %v657 = vunpack.c.l.b16 %v324
        %v658 = vunpack.c.l.b16 %v325
        %v659 = vunpack.c.l.b16 %v326
        %v660 = vunpack.c.l.b16 %v327
        %v661 = vunpack.c.l.b16 %v328
        %v662 = vunpack.c.l.b16 %v329
        %v663 = vunpack.c.l.b16 %v330
        %v664 = vpack.c.b16 %v646, %v645
        %v665 = vpack.c.b16 %v648, %v647
        %v666 = vpack.c.b16 %v650, %v649
        %v667 = vpack.c.b16 %v652, %v651
        %v668 = vpack.c.b16 %v654, %v653
        %v669 = vpack.c.b16 %v656, %v655
        %v670 = vpack.c.b16 %v658, %v657
        %v671 = vpack.c.b16 %v660, %v659
        %v672 = vpack.c.b16 %v662, %v661
        %v673 = vpack.c.b16 %v663, %v663
        %vm683 = vcmask 154624
        %v685 = vsel %vm683, %v531, 0
        %v688 = vsel %vm683, %v533, 0
        %v691 = vsel %vm683, %v535, 0
        %v694 = vsel %vm683, %v537, 0
        %v697 = vsel %vm683, %v539, 0
        %v700 = vsel %vm683, %v541, 0
        %v703 = vsel %vm683, %v543, 0
        %v706 = vsel %vm683, %v545, 0
        %v709 = vsel %vm683, %v547, 0
        %v712 = vsel %vm683, %v549, 0
        %v715 = vsel %vm683, %v551, 0
        %v718 = vsel %vm683, %v553, 0
        %v721 = vsel %vm683, %v555, 0
        %v724 = vsel %vm683, %v557, 0
        %v727 = vsel %vm683, %v559, 0
        %v730 = vsel %vm683, %v561, 0
        %v733 = vsel %vm683, %v563, 0
        %v736 = vsel %vm683, %v565, 0
        %v739 = vsel %vm683, %v567, 0
        %v742 = vsel %vm683, %v569, 0
        %v745 = vsel %vm683, %v571, 0
        %v748 = vsel %vm683, %v573, 0
        %v751 = vsel %vm683, %v575, 0
        %v754 = vsel %vm683, %v577, 0
        %v757 = vsel %vm683, %v579, 0
        %v760 = vsel %vm683, %v581, 0
        %v763 = vsel %vm683, %v583, 0
        %v766 = vsel %vm683, %v585, 0
        %v769 = vsel %vm683, %v587, 0
        %v772 = vsel %vm683, %v589, 0
        %v775 = vsel %vm683, %v591, 0
        %v778 = vsel %vm683, %v593, 0
        %vm780 = vcmask 1040384
        %vm781 = vcmask 1041408
        %v782 = vsel %vm780, 4294967295, 65535
        %v783 = vsel %vm781, %v782, 0
        %v785 = vand.u32 %v673, %v783
        %787 = vmatprep.subr.bf16.mxu0 0
        %788 = vmatpush1.bf16.msra.mxu0 %v664
        %789 = vmatprep.subr.bf16.mxu0 0
        %790 = vmatpush1.bf16.msra.mxu0 %v665
        %791 = vmatprep.subr.bf16.mxu0 0
        %792 = vmatpush1.bf16.msra.mxu0 %v666
        %793 = vmatprep.subr.bf16.mxu0 0
        %794 = vmatpush1.bf16.msra.mxu0 %v667
        %795 = vmatprep.subr.bf16.mxu0 0
        %796 = vmatpush1.bf16.msra.mxu0 %v668
        %797 = vmatprep.subr.bf16.mxu0 0
        %798 = vmatpush1.bf16.msra.mxu0 %v669
        %799 = vmatprep.subr.bf16.mxu0 0
        %800 = vmatpush1.bf16.msra.mxu0 %v670
        %801 = vmatprep.subr.bf16.mxu0 0
        %802 = vmatpush1.bf16.msra.mxu0 %v671
        %803 = vmatprep.subr.bf16.mxu0 0
        %804 = vmatpush1.bf16.msra.mxu0 %v672
        %805 = vmatprep.subr.bf16.mxu0 0
        %806 = vmatpush1.bf16.msra.mxu0 %v785
        %807 = vmatprep.subr.bf16.mxu0 0
        %808 = vmatpush1.bf16.msra.mxu0 0
        %809 = vmatprep.subr.bf16.mxu0 0
        %810 = vmatpush1.bf16.msra.mxu0 0
        %811 = vmatprep.subr.bf16.mxu0 0
        %812 = vmatpush1.bf16.msra.mxu0 0
        %813 = vmatprep.subr.bf16.mxu0 0
        %814 = vmatpush1.bf16.msra.mxu0 0
        %815 = vmatprep.subr.bf16.mxu0 0
        %816 = vmatpush1.bf16.msra.mxu0 0
        %817 = vmatprep.subr.bf16.mxu0 0
        %818 = vmatpush1.bf16.msra.mxu0 0
        %819 = vmatprep.mubr.bf16.mxu0 %v685
        %820 = vmatmul.mubr.bf16.gmra.mrb[0].mxu0 %v530
        %v821 = vpop.f32.mrb[0].mxu0
        %v822 = vadd.f32 %v336, %v821
        %v823 = vpop.f32.mrb[0].mxu0
        %v824 = vpop.f32.mrb[0].mxu0
        %v825 = vadd.f32 %v336, %v824
        %v826 = vpop.f32.mrb[0].mxu0
        %827 = vmatprep.mubr.bf16.mxu0 %v688
        %828 = vmatmul.mubr.bf16.gmra.mrb[0].mxu0 %v532
        %v829 = vpop.f32.mrb[0].mxu0
        %v830 = vadd.f32 %v336, %v829
        %v831 = vpop.f32.mrb[0].mxu0
        %v832 = vpop.f32.mrb[0].mxu0
        %v833 = vadd.f32 %v336, %v832
        %v834 = vpop.f32.mrb[0].mxu0
        %835 = vmatprep.mubr.bf16.mxu0 %v691
        %836 = vmatmul.mubr.bf16.gmra.mrb[0].mxu0 %v534
        %v837 = vpop.f32.mrb[0].mxu0
        %v838 = vadd.f32 %v336, %v837
        %v839 = vpop.f32.mrb[0].mxu0
        %v840 = vpop.f32.mrb[0].mxu0
        %v841 = vadd.f32 %v336, %v840
        %v842 = vpop.f32.mrb[0].mxu0
        %843 = vmatprep.mubr.bf16.mxu0 %v694
        %844 = vmatmul.mubr.bf16.gmra.mrb[0].mxu0 %v536
        %v845 = vpop.f32.mrb[0].mxu0
        %v846 = vadd.f32 %v336, %v845
        %v847 = vpop.f32.mrb[0].mxu0
        %v848 = vpop.f32.mrb[0].mxu0
        %v849 = vadd.f32 %v336, %v848
        %v850 = vpop.f32.mrb[0].mxu0
        %851 = vmatprep.mubr.bf16.mxu0 %v697
        %852 = vmatmul.mubr.bf16.gmra.mrb[0].mxu0 %v538
        %v853 = vpop.f32.mrb[0].mxu0
        %v854 = vadd.f32 %v336, %v853
        %v855 = vpop.f32.mrb[0].mxu0
        %v856 = vpop.f32.mrb[0].mxu0
        %v857 = vadd.f32 %v336, %v856
        %v858 = vpop.f32.mrb[0].mxu0
        %859 = vmatprep.mubr.bf16.mxu0 %v700
        %860 = vmatmul.mubr.bf16.gmra.mrb[0].mxu0 %v540
        %v861 = vpop.f32.mrb[0].mxu0
        %v862 = vadd.f32 %v336, %v861
        %v863 = vpop.f32.mrb[0].mxu0
        %v864 = vpop.f32.mrb[0].mxu0
        %v865 = vadd.f32 %v336, %v864
        %v866 = vpop.f32.mrb[0].mxu0
        %867 = vmatprep.mubr.bf16.mxu0 %v703
        %868 = vmatmul.mubr.bf16.gmra.mrb[0].mxu0 %v542
        %v869 = vpop.f32.mrb[0].mxu0
        %v870 = vadd.f32 %v336, %v869
        %v871 = vpop.f32.mrb[0].mxu0
        %v872 = vpop.f32.mrb[0].mxu0
        %v873 = vadd.f32 %v336, %v872
        %v874 = vpop.f32.mrb[0].mxu0
        %875 = vmatprep.mubr.bf16.mxu0 %v706
        %876 = vmatmul.mubr.bf16.gmra.mrb[0].mxu0 %v544
        %v877 = vpop.f32.mrb[0].mxu0
        %v878 = vadd.f32 %v336, %v877
        %v879 = vpop.f32.mrb[0].mxu0
        %v880 = vpop.f32.mrb[0].mxu0
        %v881 = vadd.f32 %v336, %v880
        %v882 = vpop.f32.mrb[0].mxu0
        %883 = vmatprep.mubr.bf16.mxu0 %v709
        %884 = vmatmul.mubr.bf16.gmra.mrb[0].mxu0 %v546
        %v885 = vpop.f32.mrb[0].mxu0
        %v886 = vadd.f32 %v336, %v885
        %v887 = vpop.f32.mrb[0].mxu0
        %v888 = vpop.f32.mrb[0].mxu0
        %v889 = vadd.f32 %v336, %v888
        %v890 = vpop.f32.mrb[0].mxu0
        %891 = vmatprep.mubr.bf16.mxu0 %v712
        %892 = vmatmul.mubr.bf16.gmra.mrb[0].mxu0 %v548
        %v893 = vpop.f32.mrb[0].mxu0
        %v894 = vadd.f32 %v336, %v893
        %v895 = vpop.f32.mrb[0].mxu0
        %v896 = vpop.f32.mrb[0].mxu0
        %v897 = vadd.f32 %v336, %v896
        %v898 = vpop.f32.mrb[0].mxu0
        %899 = vmatprep.mubr.bf16.mxu0 %v715
        %900 = vmatmul.mubr.bf16.gmra.mrb[0].mxu0 %v550
        %v901 = vpop.f32.mrb[0].mxu0
        %v902 = vadd.f32 %v336, %v901
        %v903 = vpop.f32.mrb[0].mxu0
        %v904 = vpop.f32.mrb[0].mxu0
        %v905 = vadd.f32 %v336, %v904
        %v906 = vpop.f32.mrb[0].mxu0
        %907 = vmatprep.mubr.bf16.mxu0 %v718
        %908 = vmatmul.mubr.bf16.gmra.mrb[0].mxu0 %v552
        %v909 = vpop.f32.mrb[0].mxu0
        %v910 = vadd.f32 %v336, %v909
        %v911 = vpop.f32.mrb[0].mxu0
        %v912 = vpop.f32.mrb[0].mxu0
        %v913 = vadd.f32 %v336, %v912
        %v914 = vpop.f32.mrb[0].mxu0
        %915 = vmatprep.mubr.bf16.mxu0 %v721
        %916 = vmatmul.mubr.bf16.gmra.mrb[0].mxu0 %v554
        %v917 = vpop.f32.mrb[0].mxu0
        %v918 = vadd.f32 %v336, %v917
        %v919 = vpop.f32.mrb[0].mxu0
        %v920 = vpop.f32.mrb[0].mxu0
        %v921 = vadd.f32 %v336, %v920
        %v922 = vpop.f32.mrb[0].mxu0
        %923 = vmatprep.mubr.bf16.mxu0 %v724
        %924 = vmatmul.mubr.bf16.gmra.mrb[0].mxu0 %v556
        %v925 = vpop.f32.mrb[0].mxu0
        %v926 = vadd.f32 %v336, %v925
        %v927 = vpop.f32.mrb[0].mxu0
        %v928 = vpop.f32.mrb[0].mxu0
        %v929 = vadd.f32 %v336, %v928
        %v930 = vpop.f32.mrb[0].mxu0
        %931 = vmatprep.mubr.bf16.mxu0 %v727
        %932 = vmatmul.mubr.bf16.gmra.mrb[0].mxu0 %v558
        %v933 = vpop.f32.mrb[0].mxu0
        %v934 = vadd.f32 %v336, %v933
        %v935 = vpop.f32.mrb[0].mxu0
        %v936 = vpop.f32.mrb[0].mxu0
        %v937 = vadd.f32 %v336, %v936
        %v938 = vpop.f32.mrb[0].mxu0
        %939 = vmatprep.mubr.bf16.mxu0 %v730
        %940 = vmatmul.mubr.bf16.gmra.mrb[0].mxu0 %v560
        %v941 = vpop.f32.mrb[0].mxu0
        %v942 = vadd.f32 %v336, %v941
        %v943 = vpop.f32.mrb[0].mxu0
        %v944 = vpop.f32.mrb[0].mxu0
        %v945 = vadd.f32 %v336, %v944
        %v946 = vpop.f32.mrb[0].mxu0
        %947 = vmatprep.mubr.bf16.mxu0 %v733
        %948 = vmatmul.mubr.bf16.gmra.mrb[0].mxu0 %v562
        %v949 = vpop.f32.mrb[0].mxu0
        %v950 = vadd.f32 %v336, %v949
        %v951 = vpop.f32.mrb[0].mxu0
        %v952 = vpop.f32.mrb[0].mxu0
        %v953 = vadd.f32 %v336, %v952
        %v954 = vpop.f32.mrb[0].mxu0
        %955 = vmatprep.mubr.bf16.mxu0 %v736
        %956 = vmatmul.mubr.bf16.gmra.mrb[0].mxu0 %v564
        %v957 = vpop.f32.mrb[0].mxu0
        %v958 = vadd.f32 %v336, %v957
        %v959 = vpop.f32.mrb[0].mxu0
        %v960 = vpop.f32.mrb[0].mxu0
        %v961 = vadd.f32 %v336, %v960
        %v962 = vpop.f32.mrb[0].mxu0
        %963 = vmatprep.mubr.bf16.mxu0 %v739
        %964 = vmatmul.mubr.bf16.gmra.mrb[0].mxu0 %v566
        %v965 = vpop.f32.mrb[0].mxu0
        %v966 = vadd.f32 %v336, %v965
        %v967 = vpop.f32.mrb[0].mxu0
        %v968 = vpop.f32.mrb[0].mxu0
        %v969 = vadd.f32 %v336, %v968
        %v970 = vpop.f32.mrb[0].mxu0
        %971 = vmatprep.mubr.bf16.mxu0 %v742
        %972 = vmatmul.mubr.bf16.gmra.mrb[0].mxu0 %v568
        %v973 = vpop.f32.mrb[0].mxu0
        %v974 = vadd.f32 %v336, %v973
        %v975 = vpop.f32.mrb[0].mxu0
        %v976 = vpop.f32.mrb[0].mxu0
        %v977 = vadd.f32 %v336, %v976
        %v978 = vpop.f32.mrb[0].mxu0
        %979 = vmatprep.mubr.bf16.mxu0 %v745
        %980 = vmatmul.mubr.bf16.gmra.mrb[0].mxu0 %v570
        %v981 = vpop.f32.mrb[0].mxu0
        %v982 = vadd.f32 %v336, %v981
        %v983 = vpop.f32.mrb[0].mxu0
        %v984 = vpop.f32.mrb[0].mxu0
        %v985 = vadd.f32 %v336, %v984
        %v986 = vpop.f32.mrb[0].mxu0
        %987 = vmatprep.mubr.bf16.mxu0 %v748
        %988 = vmatmul.mubr.bf16.gmra.mrb[0].mxu0 %v572
        %v989 = vpop.f32.mrb[0].mxu0
        %v990 = vadd.f32 %v336, %v989
        %v991 = vpop.f32.mrb[0].mxu0
        %v992 = vpop.f32.mrb[0].mxu0
        %v993 = vadd.f32 %v336, %v992
        %v994 = vpop.f32.mrb[0].mxu0
        %995 = vmatprep.mubr.bf16.mxu0 %v751
        %996 = vmatmul.mubr.bf16.gmra.mrb[0].mxu0 %v574
        %v997 = vpop.f32.mrb[0].mxu0
        %v998 = vadd.f32 %v336, %v997
        %v999 = vpop.f32.mrb[0].mxu0
        %v1000 = vpop.f32.mrb[0].mxu0
        %v1001 = vadd.f32 %v336, %v1000
        %v1002 = vpop.f32.mrb[0].mxu0
        %1003 = vmatprep.mubr.bf16.mxu0 %v754
        %1004 = vmatmul.mubr.bf16.gmra.mrb[0].mxu0 %v576
        %v1005 = vpop.f32.mrb[0].mxu0
        %v1006 = vadd.f32 %v336, %v1005
        %v1007 = vpop.f32.mrb[0].mxu0
        %v1008 = vpop.f32.mrb[0].mxu0
        %v1009 = vadd.f32 %v336, %v1008
        %v1010 = vpop.f32.mrb[0].mxu0
        %1011 = vmatprep.mubr.bf16.mxu0 %v757
        %1012 = vmatmul.mubr.bf16.gmra.mrb[0].mxu0 %v578
        %v1013 = vpop.f32.mrb[0].mxu0
        %v1014 = vadd.f32 %v336, %v1013
        %v1015 = vpop.f32.mrb[0].mxu0
        %v1016 = vpop.f32.mrb[0].mxu0
        %v1017 = vadd.f32 %v336, %v1016
        %v1018 = vpop.f32.mrb[0].mxu0
        %1019 = vmatprep.mubr.bf16.mxu0 %v760
        %1020 = vmatmul.mubr.bf16.gmra.mrb[0].mxu0 %v580
        %v1021 = vpop.f32.mrb[0].mxu0
        %v1022 = vadd.f32 %v336, %v1021
        %v1023 = vpop.f32.mrb[0].mxu0
        %v1024 = vpop.f32.mrb[0].mxu0
        %v1025 = vadd.f32 %v336, %v1024
        %v1026 = vpop.f32.mrb[0].mxu0
        %1027 = vmatprep.mubr.bf16.mxu0 %v763
        %1028 = vmatmul.mubr.bf16.gmra.mrb[0].mxu0 %v582
        %v1029 = vpop.f32.mrb[0].mxu0
        %v1030 = vadd.f32 %v336, %v1029
        %v1031 = vpop.f32.mrb[0].mxu0
        %v1032 = vpop.f32.mrb[0].mxu0
        %v1033 = vadd.f32 %v336, %v1032
        %v1034 = vpop.f32.mrb[0].mxu0
        %1035 = vmatprep.mubr.bf16.mxu0 %v766
        %1036 = vmatmul.mubr.bf16.gmra.mrb[0].mxu0 %v584
        %v1037 = vpop.f32.mrb[0].mxu0
        %v1038 = vadd.f32 %v336, %v1037
        %v1039 = vpop.f32.mrb[0].mxu0
        %v1040 = vpop.f32.mrb[0].mxu0
        %v1041 = vadd.f32 %v336, %v1040
        %v1042 = vpop.f32.mrb[0].mxu0
        %1043 = vmatprep.mubr.bf16.mxu0 %v769
        %1044 = vmatmul.mubr.bf16.gmra.mrb[0].mxu0 %v586
        %v1045 = vpop.f32.mrb[0].mxu0
        %v1046 = vadd.f32 %v336, %v1045
        %v1047 = vpop.f32.mrb[0].mxu0
        %v1048 = vpop.f32.mrb[0].mxu0
        %v1049 = vadd.f32 %v336, %v1048
        %v1050 = vpop.f32.mrb[0].mxu0
        %1051 = vmatprep.mubr.bf16.mxu0 %v772
        %1052 = vmatmul.mubr.bf16.gmra.mrb[0].mxu0 %v588
        %v1053 = vpop.f32.mrb[0].mxu0
        %v1054 = vadd.f32 %v336, %v1053
        %v1055 = vpop.f32.mrb[0].mxu0
        %v1056 = vpop.f32.mrb[0].mxu0
        %v1057 = vadd.f32 %v336, %v1056
        %v1058 = vpop.f32.mrb[0].mxu0
        %1059 = vmatprep.mubr.bf16.mxu0 %v775
        %1060 = vmatmul.mubr.bf16.gmra.mrb[0].mxu0 %v590
        %v1061 = vpop.f32.mrb[0].mxu0
        %v1062 = vadd.f32 %v336, %v1061
        %v1063 = vpop.f32.mrb[0].mxu0
        %v1064 = vpop.f32.mrb[0].mxu0
        %v1065 = vadd.f32 %v336, %v1064
        %v1066 = vpop.f32.mrb[0].mxu0
        %1067 = vmatprep.mubr.bf16.mxu0 %v778
        %1068 = vmatmul.mubr.bf16.gmra.mrb[0].mxu0 %v592
        %v1069 = vpop.f32.mrb[0].mxu0
        %v1070 = vadd.f32 %v336, %v1069
        %v1071 = vpop.f32.mrb[0].mxu0
        %v1072 = vpop.f32.mrb[0].mxu0
        %v1073 = vadd.f32 %v336, %v1072
        %v1074 = vpop.f32.mrb[0].mxu0
        %1075 = vdwg.mxu0
        %v1076 = vmax.f32 %v822, 0.0
        %v1077 = vmax.f32 %v825, 0.0
        %v1078 = vmax.f32 %v830, 0.0
        %v1079 = vmax.f32 %v833, 0.0
        %v1080 = vmax.f32 %v838, 0.0
        %v1081 = vmax.f32 %v841, 0.0
        %v1082 = vmax.f32 %v846, 0.0
        %v1083 = vmax.f32 %v849, 0.0
        %v1084 = vmax.f32 %v854, 0.0
        %v1085 = vmax.f32 %v857, 0.0
        %v1086 = vmax.f32 %v862, 0.0
        %v1087 = vmax.f32 %v865, 0.0
        %v1088 = vmax.f32 %v870, 0.0
        %v1089 = vmax.f32 %v873, 0.0
        %v1090 = vmax.f32 %v878, 0.0
        %v1091 = vmax.f32 %v881, 0.0
        %v1092 = vmax.f32 %v886, 0.0
        %v1093 = vmax.f32 %v889, 0.0
        %v1094 = vmax.f32 %v894, 0.0
        %v1095 = vmax.f32 %v897, 0.0
        %v1096 = vmax.f32 %v902, 0.0
        %v1097 = vmax.f32 %v905, 0.0
        %v1098 = vmax.f32 %v910, 0.0
        %v1099 = vmax.f32 %v913, 0.0
        %v1100 = vmax.f32 %v918, 0.0
        %v1101 = vmax.f32 %v921, 0.0
        %v1102 = vmax.f32 %v926, 0.0
        %v1103 = vmax.f32 %v929, 0.0
        %v1104 = vmax.f32 %v934, 0.0
        %v1105 = vmax.f32 %v937, 0.0
        %v1106 = vmax.f32 %v942, 0.0
        %v1107 = vmax.f32 %v945, 0.0
        %v1108 = vmax.f32 %v950, 0.0
        %v1109 = vmax.f32 %v953, 0.0
        %v1110 = vmax.f32 %v958, 0.0
        %v1111 = vmax.f32 %v961, 0.0
        %v1112 = vmax.f32 %v966, 0.0
        %v1113 = vmax.f32 %v969, 0.0
        %v1114 = vmax.f32 %v974, 0.0
        %v1115 = vmax.f32 %v977, 0.0
        %v1116 = vmax.f32 %v982, 0.0
        %v1117 = vmax.f32 %v985, 0.0
        %v1118 = vmax.f32 %v990, 0.0
        %v1119 = vmax.f32 %v993, 0.0
        %v1120 = vmax.f32 %v998, 0.0
        %v1121 = vmax.f32 %v1001, 0.0
        %v1122 = vmax.f32 %v1006, 0.0
        %v1123 = vmax.f32 %v1009, 0.0
        %v1124 = vmax.f32 %v1014, 0.0
        %v1125 = vmax.f32 %v1017, 0.0
        %v1126 = vmax.f32 %v1022, 0.0
        %v1127 = vmax.f32 %v1025, 0.0
        %v1128 = vmax.f32 %v1030, 0.0
        %v1129 = vmax.f32 %v1033, 0.0
        %v1130 = vmax.f32 %v1038, 0.0
        %v1131 = vmax.f32 %v1041, 0.0
        %v1132 = vmax.f32 %v1046, 0.0
        %v1133 = vmax.f32 %v1049, 0.0
        %v1134 = vmax.f32 %v1054, 0.0
        %v1135 = vmax.f32 %v1057, 0.0
        %v1136 = vmax.f32 %v1062, 0.0
        %v1137 = vmax.f32 %v1065, 0.0
        %v1138 = vmax.f32 %v1070, 0.0
        %v1139 = vmax.f32 %v1073, 0.0
        %v1140 = vpack.c.bf16 %v1077, %v1076
        %v1141 = vpack.c.bf16 %v1079, %v1078
        %v1142 = vpack.c.bf16 %v1081, %v1080
        %v1143 = vpack.c.bf16 %v1083, %v1082
        %v1144 = vpack.c.bf16 %v1085, %v1084
        %v1145 = vpack.c.bf16 %v1087, %v1086
        %v1146 = vpack.c.bf16 %v1089, %v1088
        %v1147 = vpack.c.bf16 %v1091, %v1090
        %v1148 = vpack.c.bf16 %v1093, %v1092
        %v1149 = vpack.c.bf16 %v1095, %v1094
        %v1150 = vpack.c.bf16 %v1097, %v1096
        %v1151 = vpack.c.bf16 %v1099, %v1098
        %v1152 = vpack.c.bf16 %v1101, %v1100
        %v1153 = vpack.c.bf16 %v1103, %v1102
        %v1154 = vpack.c.bf16 %v1105, %v1104
        %v1155 = vpack.c.bf16 %v1107, %v1106
        %v1156 = vpack.c.bf16 %v1109, %v1108
        %v1157 = vpack.c.bf16 %v1111, %v1110
        %v1158 = vpack.c.bf16 %v1113, %v1112
        %v1159 = vpack.c.bf16 %v1115, %v1114
        %v1160 = vpack.c.bf16 %v1117, %v1116
        %v1161 = vpack.c.bf16 %v1119, %v1118
        %v1162 = vpack.c.bf16 %v1121, %v1120
        %v1163 = vpack.c.bf16 %v1123, %v1122
        %v1164 = vpack.c.bf16 %v1125, %v1124
        %v1165 = vpack.c.bf16 %v1127, %v1126
        %v1166 = vpack.c.bf16 %v1129, %v1128
        %v1167 = vpack.c.bf16 %v1131, %v1130
        %v1168 = vpack.c.bf16 %v1133, %v1132
        %v1169 = vpack.c.bf16 %v1135, %v1134
        %v1170 = vpack.c.bf16 %v1137, %v1136
        %v1171 = vpack.c.bf16 %v1139, %v1138
        %v1204 = vunpack.c.l.b16 %v1140
        %v1205 = vunpack.c.h.b16 %v1140
        %v1206 = vunpack.c.l.b16 %v1141
        %v1207 = vunpack.c.h.b16 %v1141
        %v1208 = vunpack.c.l.b16 %v1142
        %v1209 = vunpack.c.h.b16 %v1142
        %v1210 = vunpack.c.l.b16 %v1143
        %v1211 = vunpack.c.h.b16 %v1143
        %v1212 = vunpack.c.l.b16 %v1144
        %v1213 = vunpack.c.h.b16 %v1144
        %v1214 = vunpack.c.l.b16 %v1145
        %v1215 = vunpack.c.h.b16 %v1145
        %v1216 = vunpack.c.l.b16 %v1146
        %v1217 = vunpack.c.h.b16 %v1146
        %v1218 = vunpack.c.l.b16 %v1147
        %v1219 = vunpack.c.h.b16 %v1147
        %v1220 = vunpack.c.l.b16 %v1148
        %v1221 = vunpack.c.h.b16 %v1148
        %v1222 = vunpack.c.l.b16 %v1149
        %v1223 = vunpack.c.h.b16 %v1149
        %v1224 = vunpack.c.l.b16 %v1150
        %v1225 = vunpack.c.h.b16 %v1150
        %v1226 = vunpack.c.l.b16 %v1151
        %v1227 = vunpack.c.h.b16 %v1151
        %v1228 = vunpack.c.l.b16 %v1152
        %v1229 = vunpack.c.h.b16 %v1152
        %v1230 = vunpack.c.l.b16 %v1153
        %v1231 = vunpack.c.h.b16 %v1153
        %v1232 = vunpack.c.l.b16 %v1154
        %v1233 = vunpack.c.h.b16 %v1154
        %v1234 = vunpack.c.l.b16 %v1155
        %v1235 = vunpack.c.h.b16 %v1155
        %v1236 = vunpack.c.l.b16 %v1156
        %v1237 = vunpack.c.h.b16 %v1156
        %v1238 = vunpack.c.l.b16 %v1157
        %v1239 = vunpack.c.h.b16 %v1157
        %v1240 = vunpack.c.l.b16 %v1158
        %v1241 = vunpack.c.h.b16 %v1158
        %v1242 = vunpack.c.l.b16 %v1159
        %v1243 = vunpack.c.h.b16 %v1159
        %v1244 = vunpack.c.l.b16 %v1160
        %v1245 = vunpack.c.h.b16 %v1160
        %v1246 = vunpack.c.l.b16 %v1161
        %v1247 = vunpack.c.h.b16 %v1161
        %v1248 = vunpack.c.l.b16 %v1162
        %v1249 = vunpack.c.h.b16 %v1162
        %v1250 = vunpack.c.l.b16 %v1163
        %v1251 = vunpack.c.h.b16 %v1163
        %v1252 = vunpack.c.l.b16 %v1164
        %v1253 = vunpack.c.h.b16 %v1164
        %v1254 = vunpack.c.l.b16 %v1165
        %v1255 = vunpack.c.h.b16 %v1165
        %v1256 = vunpack.c.l.b16 %v1166
        %v1257 = vunpack.c.h.b16 %v1166
        %v1258 = vunpack.c.l.b16 %v1167
        %v1259 = vunpack.c.h.b16 %v1167
        %v1260 = vunpack.c.l.b16 %v1168
        %v1261 = vunpack.c.h.b16 %v1168
        %v1262 = vunpack.c.l.b16 %v1169
        %v1263 = vunpack.c.h.b16 %v1169
        %v1264 = vunpack.c.l.b16 %v1170
        %v1265 = vunpack.c.h.b16 %v1170
        %v1266 = vunpack.c.l.b16 %v1171
        %v1267 = vunpack.c.h.b16 %v1171
        %v1268 = vpack.c.b16 %v1204, %v1204
        %v1269 = vpack.c.b16 %v1205, %v1205
        %v1270 = vpack.c.b16 %v1206, %v1206
        %v1271 = vpack.c.b16 %v1207, %v1207
        %v1272 = vpack.c.b16 %v1208, %v1208
        %v1273 = vpack.c.b16 %v1209, %v1209
        %v1274 = vpack.c.b16 %v1210, %v1210
        %v1275 = vpack.c.b16 %v1211, %v1211
        %v1276 = vpack.c.b16 %v1212, %v1212
        %v1277 = vpack.c.b16 %v1213, %v1213
        %v1278 = vpack.c.b16 %v1214, %v1214
        %v1279 = vpack.c.b16 %v1215, %v1215
        %v1280 = vpack.c.b16 %v1216, %v1216
        %v1281 = vpack.c.b16 %v1217, %v1217
        %v1282 = vpack.c.b16 %v1218, %v1218
        %v1283 = vpack.c.b16 %v1219, %v1219
        %v1284 = vpack.c.b16 %v1220, %v1220
        %v1285 = vpack.c.b16 %v1221, %v1221
        %v1286 = vpack.c.b16 %v1222, %v1222
        %v1287 = vpack.c.b16 %v1223, %v1223
        %v1288 = vpack.c.b16 %v1224, %v1224
        %v1289 = vpack.c.b16 %v1225, %v1225
        %v1290 = vpack.c.b16 %v1226, %v1226
        %v1291 = vpack.c.b16 %v1227, %v1227
        %v1292 = vpack.c.b16 %v1228, %v1228
        %v1293 = vpack.c.b16 %v1229, %v1229
        %v1294 = vpack.c.b16 %v1230, %v1230
        %v1295 = vpack.c.b16 %v1231, %v1231
        %v1296 = vpack.c.b16 %v1232, %v1232
        %v1297 = vpack.c.b16 %v1233, %v1233
        %v1298 = vpack.c.b16 %v1234, %v1234
        %v1299 = vpack.c.b16 %v1235, %v1235
        %v1300 = vpack.c.b16 %v1236, %v1236
        %v1301 = vpack.c.b16 %v1237, %v1237
        %v1302 = vpack.c.b16 %v1238, %v1238
        %v1303 = vpack.c.b16 %v1239, %v1239
        %v1304 = vpack.c.b16 %v1240, %v1240
        %v1305 = vpack.c.b16 %v1241, %v1241
        %v1306 = vpack.c.b16 %v1242, %v1242
        %v1307 = vpack.c.b16 %v1243, %v1243
        %v1308 = vpack.c.b16 %v1244, %v1244
        %v1309 = vpack.c.b16 %v1245, %v1245
        %v1310 = vpack.c.b16 %v1246, %v1246
        %v1311 = vpack.c.b16 %v1247, %v1247
        %v1312 = vpack.c.b16 %v1248, %v1248
        %v1313 = vpack.c.b16 %v1249, %v1249
        %v1314 = vpack.c.b16 %v1250, %v1250
        %v1315 = vpack.c.b16 %v1251, %v1251
        %v1316 = vpack.c.b16 %v1252, %v1252
        %v1317 = vpack.c.b16 %v1253, %v1253
        %v1318 = vpack.c.b16 %v1254, %v1254
        %v1319 = vpack.c.b16 %v1255, %v1255
        %v1320 = vpack.c.b16 %v1256, %v1256
        %v1321 = vpack.c.b16 %v1257, %v1257
        %v1322 = vpack.c.b16 %v1258, %v1258
        %v1323 = vpack.c.b16 %v1259, %v1259
        %v1324 = vpack.c.b16 %v1260, %v1260
        %v1325 = vpack.c.b16 %v1261, %v1261
        %v1326 = vpack.c.b16 %v1262, %v1262
        %v1327 = vpack.c.b16 %v1263, %v1263
        %v1328 = vpack.c.b16 %v1264, %v1264
        %v1329 = vpack.c.b16 %v1265, %v1265
        %v1330 = vpack.c.b16 %v1266, %v1266
        %v1331 = vpack.c.b16 %v1267, %v1267
        %vm1396 = vcmask 519168
        %1397 = vst.msk [vmem:[%s244] sm:$0xf] %vm1396, %v1268
        %1398 = vst.msk [vmem:[%s244 + $0x4] sm:$0xf] %vm1396, %v1269
        %1399 = vst.msk [vmem:[%s244 + $0x8] sm:$0xf] %vm1396, %v1270
        %1400 = vst.msk [vmem:[%s244 + $0xc] sm:$0xf] %vm1396, %v1271
        %1401 = vst.msk [vmem:[%s244 + $0x10] sm:$0xf] %vm1396, %v1272
        %1402 = vst.msk [vmem:[%s244 + $0x14] sm:$0xf] %vm1396, %v1273
        %1403 = vst.msk [vmem:[%s244 + $0x18] sm:$0xf] %vm1396, %v1274
        %1404 = vst.msk [vmem:[%s244 + $0x1c] sm:$0xf] %vm1396, %v1275
        %1405 = vst.msk [vmem:[%s244 + $0x20] sm:$0xf] %vm1396, %v1276
        %1406 = vst.msk [vmem:[%s244 + $0x24] sm:$0xf] %vm1396, %v1277
        %1407 = vst.msk [vmem:[%s244 + $0x28] sm:$0xf] %vm1396, %v1278
        %1408 = vst.msk [vmem:[%s244 + $0x2c] sm:$0xf] %vm1396, %v1279
        %1409 = vst.msk [vmem:[%s244 + $0x30] sm:$0xf] %vm1396, %v1280
        %1410 = vst.msk [vmem:[%s244 + $0x34] sm:$0xf] %vm1396, %v1281
        %1411 = vst.msk [vmem:[%s244 + $0x38] sm:$0xf] %vm1396, %v1282
        %1412 = vst.msk [vmem:[%s244 + $0x3c] sm:$0xf] %vm1396, %v1283
        %1413 = vst.msk [vmem:[%s244 + $0x40] sm:$0xf] %vm1396, %v1284
        %1414 = vst.msk [vmem:[%s244 + $0x44] sm:$0xf] %vm1396, %v1285
        %1415 = vst.msk [vmem:[%s244 + $0x48] sm:$0xf] %vm1396, %v1286
        %1416 = vst.msk [vmem:[%s244 + $0x4c] sm:$0xf] %vm1396, %v1287
        %1417 = vst.msk [vmem:[%s244 + $0x50] sm:$0xf] %vm1396, %v1288
        %1418 = vst.msk [vmem:[%s244 + $0x54] sm:$0xf] %vm1396, %v1289
        %1419 = vst.msk [vmem:[%s244 + $0x58] sm:$0xf] %vm1396, %v1290
        %1420 = vst.msk [vmem:[%s244 + $0x5c] sm:$0xf] %vm1396, %v1291
        %1421 = vst.msk [vmem:[%s244 + $0x60] sm:$0xf] %vm1396, %v1292
        %1422 = vst.msk [vmem:[%s244 + $0x64] sm:$0xf] %vm1396, %v1293
        %1423 = vst.msk [vmem:[%s244 + $0x68] sm:$0xf] %vm1396, %v1294
        %1424 = vst.msk [vmem:[%s244 + $0x6c] sm:$0xf] %vm1396, %v1295
        %1425 = vst.msk [vmem:[%s244 + $0x70] sm:$0xf] %vm1396, %v1296
        %1426 = vst.msk [vmem:[%s244 + $0x74] sm:$0xf] %vm1396, %v1297
        %1427 = vst.msk [vmem:[%s244 + $0x78] sm:$0xf] %vm1396, %v1298
        %1428 = vst.msk [vmem:[%s244 + $0x7c] sm:$0xf] %vm1396, %v1299
        %1429 = vst.msk [vmem:[%s244 + $0x80] sm:$0xf] %vm1396, %v1300
        %1430 = vst.msk [vmem:[%s244 + $0x84] sm:$0xf] %vm1396, %v1301
        %1431 = vst.msk [vmem:[%s244 + $0x88] sm:$0xf] %vm1396, %v1302
        %1432 = vst.msk [vmem:[%s244 + $0x8c] sm:$0xf] %vm1396, %v1303
        %1433 = vst.msk [vmem:[%s244 + $0x90] sm:$0xf] %vm1396, %v1304
        %1434 = vst.msk [vmem:[%s244 + $0x94] sm:$0xf] %vm1396, %v1305
        %1435 = vst.msk [vmem:[%s244 + $0x98] sm:$0xf] %vm1396, %v1306
        %1436 = vst.msk [vmem:[%s244 + $0x9c] sm:$0xf] %vm1396, %v1307
        %1437 = vst.msk [vmem:[%s244 + $0xa0] sm:$0xf] %vm1396, %v1308
        %1438 = vst.msk [vmem:[%s244 + $0xa4] sm:$0xf] %vm1396, %v1309
        %1439 = vst.msk [vmem:[%s244 + $0xa8] sm:$0xf] %vm1396, %v1310
        %1440 = vst.msk [vmem:[%s244 + $0xac] sm:$0xf] %vm1396, %v1311
        %1441 = vst.msk [vmem:[%s244 + $0xb0] sm:$0xf] %vm1396, %v1312
        %1442 = vst.msk [vmem:[%s244 + $0xb4] sm:$0xf] %vm1396, %v1313
        %1443 = vst.msk [vmem:[%s244 + $0xb8] sm:$0xf] %vm1396, %v1314
        %1444 = vst.msk [vmem:[%s244 + $0xbc] sm:$0xf] %vm1396, %v1315
        %1445 = vst.msk [vmem:[%s244 + $0xc0] sm:$0xf] %vm1396, %v1316
        %1446 = vst.msk [vmem:[%s244 + $0xc4] sm:$0xf] %vm1396, %v1317
        %1447 = vst.msk [vmem:[%s244 + $0xc8] sm:$0xf] %vm1396, %v1318
        %1448 = vst.msk [vmem:[%s244 + $0xcc] sm:$0xf] %vm1396, %v1319
        %1449 = vst.msk [vmem:[%s244 + $0xd0] sm:$0xf] %vm1396, %v1320
        %1450 = vst.msk [vmem:[%s244 + $0xd4] sm:$0xf] %vm1396, %v1321
        %1451 = vst.msk [vmem:[%s244 + $0xd8] sm:$0xf] %vm1396, %v1322
        %1452 = vst.msk [vmem:[%s244 + $0xdc] sm:$0xf] %vm1396, %v1323
        %1453 = vst.msk [vmem:[%s244 + $0xe0] sm:$0xf] %vm1396, %v1324
        %1454 = vst.msk [vmem:[%s244 + $0xe4] sm:$0xf] %vm1396, %v1325
        %1455 = vst.msk [vmem:[%s244 + $0xe8] sm:$0xf] %vm1396, %v1326
        %1456 = vst.msk [vmem:[%s244 + $0xec] sm:$0xf] %vm1396, %v1327
        %1457 = vst.msk [vmem:[%s244 + $0xf0] sm:$0xf] %vm1396, %v1328
        %1458 = vst.msk [vmem:[%s244 + $0xf4] sm:$0xf] %vm1396, %v1329
        %1459 = vst.msk [vmem:[%s244 + $0xf8] sm:$0xf] %vm1396, %v1330
        %1460 = vst.msk [vmem:[%s244 + $0xfc] sm:$0xf] %vm1396, %v1331
        %s1461 = sand.u32 %s121, 1
        %s1462 = scalar_lea.sflag [#allocation4], %s1461
        %s1463 = sand.u32 %s121, 1
        %s1464 = smul.addr %s1463, 256
        %s1465 = scalar_lea.vmem [#allocation8], %s1464
        // Predicated region
        $region45: #{tpu_custom_call.1} parent=31 // pred_check
          %p1466 = pneg %p131
        $region46: #{tpu_custom_call.1} parent=31 // pred_check_branch
          %1468 = sbr.rel (%p1466) target = $region48
        $region47: #{tpu_custom_call.1} parent=31 // pred_region
          %s1469 = smul.u32 64, %s26
          %s1471 = ssub.s32 4096, 4096
          %1472 = vsyncadd %s1462, %s1471
          %s1473 = sadd.s32 %s25, %s1469
          %s1474 = smul.addr %s1473, 64
          %s1475 = scalar_lea.hbm %s3, %s1474
          %s1476 = sshll.u32 %s1465, 4
          %s1477 = int_to_ptr.vmem [resolvable:$true] %s1476
          %1482 = dma.vmem_to_hbm [thread:$0]  %s1477, 4096, %s1475, %s1462, 64, 64, 4
        $region48: #{tpu_custom_call.1} parent=31 // pred_fallthru
          _
      $region32: #{tpu_custom_call.1} parent=5 // pred_fallthru
        _
      %p1483 = scmp.le.s32.totalorder 2, %s16
      // Predicated region
      $region49: #{tpu_custom_call.1} parent=5 // pred_check
        %p1484 = pneg %p1483
      $region50: #{tpu_custom_call.1} parent=5 // pred_check_branch
        %1486 = sbr.rel (%p1484) target = $region52
      $region51: #{tpu_custom_call.1} parent=5 // pred_region
        %s1487 = ssub.s32 %s16, 2
        // Predicated region
        $region53: #{tpu_custom_call.1} parent=51 // pred_check
          %p1488 = pneg %p137
        $region54: #{tpu_custom_call.1} parent=51 // pred_check_branch
          %1490 = sbr.rel (%p1488) target = $region56
        $region55: #{tpu_custom_call.1} parent=51 // pred_region
          %s1491 = sand.u32 %s122, 1
          %s1492 = scalar_lea.sflag [#allocation4], %s1491
          %s1493 = sand.u32 %s122, 1
          %s1494 = smul.addr %s1493, 256
          %s1495 = scalar_lea.vmem [#allocation8], %s1494
          %1496 = dma.done %s1492, 4096
        $region56: #{tpu_custom_call.1} parent=51 // pred_fallthru
          _
      $region52: #{tpu_custom_call.1} parent=5 // pred_fallthru
        _
    $region6: #{tpu_custom_call.1} parent=1 // loop_footer
      %s20 = sadd.s32 1, %s16
    $region7: #{tpu_custom_call.1} parent=1 // loop_footer_branch
      %15 = sbr.rel target = $region3
    $region8: #{tpu_custom_call.1} parent=1 // loop_exit
      _
    %1497 = vsyncpa [#allocation3], 1
    %s1498 = scalar_lea.sflag [#allocation3], 1
    %1499 = vsyncpa %s1498, 1
    %1500 = vsyncpa [#allocation6], 1
    %1501 = vsyncpa [#allocation4], 1
    %s1502 = scalar_lea.sflag [#allocation4], 1
    %1503 = vsyncpa %s1502, 1

</llo_original>
